<compile_context>
chip_gen: v6e
topology: v6e:2x2x1
jax: 0.10.0
libtpu: 0.0.40
codegen_flags: <defaults>
</compile_context>

<pallas_src>
import math
import functools

import jax
import jax.numpy as jnp
from jax import lax
from jax.experimental import pallas as pl
from jax.experimental.pallas import tpu as pltpu


def _layernorm_f32(x, w, b, eps=1e-5):
    # x: (L, D), w/b: (1, D).  Math in f32 regardless of input dtype.
    x = x.astype(jnp.float32)
    mu = jnp.mean(x, axis=-1, keepdims=True)
    var = jnp.mean((x - mu) ** 2, axis=-1, keepdims=True)
    return (x - mu) * lax.rsqrt(var + eps) * w.astype(jnp.float32) \
        + b.astype(jnp.float32)


def layer_attention_kernel(x_ref, lat_ref,
                           ln1w_ref, ln1b_ref, ln2w_ref, ln2b_ref,
                           wq_ref, wk_ref, wv_ref, wo_ref,
                           o_ref,
                           xn_ref, lq_ref, og_ref, acc_ref,
                           *, dim_head, head_block):
    g = pl.program_id(1)

    # Per-batch prologue (group 0): cache the two LayerNorms in VMEM scratch
    # (in the MXU operand dtype) and zero the output-projection accumulator.
    @pl.when(g == 0)
    def _init():
        xn_ref[...] = _layernorm_f32(
            x_ref[...], ln1w_ref[...], ln1b_ref[...]).astype(xn_ref.dtype)
        lq = _layernorm_f32(lat_ref[...], ln2w_ref[...], ln2b_ref[...])
        # Fold the full 1/sqrt(dim_head) attention scale in exactly once (f32).
        lq_ref[...] = (lq * (1.0 / math.sqrt(dim_head))).astype(lq_ref.dtype)
        acc_ref[...] = jnp.zeros_like(acc_ref)

    cdt = x_ref.dtype          # MXU operand dtype (bf16 inputs -> bf16 matmuls)
    xn = xn_ref[...]           # (n1, kv_dim)
    lq = lq_ref[...]           # (n2, dim), already scaled

    # Per-group projections (this group's weight slabs only); results come out
    # of the MXU already in the operand dtype (internal accumulation is f32).
    q = jnp.dot(lq, wq_ref[...], preferred_element_type=cdt)   # (n2, hb*dh)
    k = jnp.dot(xn, wk_ref[...], preferred_element_type=cdt)   # (n1, hb*dh)
    v = jnp.dot(xn, wv_ref[...], preferred_element_type=cdt)   # (n1, hb*dh)

    # Per-head attention inside the group (static unrolled loop, static slices).
    for h in range(head_block):
        lo = h * dim_head
        hi = lo + dim_head
        # Scores: contract last dims directly — no k.T / XLU transpose.
        s = lax.dot_general(q[:, lo:hi], k[:, lo:hi],
                            (((1,), (1,)), ((), ())),
                            preferred_element_type=jnp.float32)   # (n2, n1) f32
        # Numerically-stable softmax with DEFERRED normalization.
        s = s - jnp.max(s, axis=-1, keepdims=True)
        p = jnp.exp(s)
        denom = jnp.sum(p, axis=-1, keepdims=True)                # (n2, 1) f32
        o_h = jnp.dot(p.astype(cdt), v[:, lo:hi],
                      preferred_element_type=jnp.float32)         # (n2, dh) f32
        o_h = o_h * pl.reciprocal(denom, approx=True)             # EUP slot
        og_ref[:, lo:hi] = o_h.astype(cdt)

    # One output-projection matmul per group (K = head_block*dim_head) into the
    # resident f32 accumulator — no per-head K=dh matmuls, no concatenate.
    acc_ref[...] += jnp.dot(og_ref[...], wo_ref[...],
                            preferred_element_type=jnp.float32)   # (n2, dim)

    @pl.when(g == pl.num_programs(1) - 1)
    def _finalize():
        # Production DIM (3072) is a multiple of 128 -> lane-dense stores.
        o_ref[...] = acc_ref[...].astype(o_ref.dtype)


def _pick_head_block(heads, dim_head, target_k=256):
    # Largest divisor of `heads` whose group width head_block*dim_head <= target_k.
    # (Use target_k=128 on v5e to match its 128-deep MXU.)
    hb = max(1, min(heads, target_k // max(dim_head, 1)))
    while heads % hb:
        hb -= 1
    return hb


def layer_attention(x, latents, params, *, heads, dim_head, head_block=None):
    """x: (B, N1, KV_DIM), latents: (B, N2, DIM) -> (B, N2, DIM)."""
    B, N1, KV = x.shape
    _, N2, DIM = latents.shape
    dh = dim_head

    if head_block is None:
        head_block = _pick_head_block(heads, dim_head)
    assert heads % head_block == 0
    G = heads // head_block
    KB = head_block * dh            # group weight width

    ln1w, ln1b, ln2w, ln2b, wq, wk, wv, wo = params

    # Split projection weights per head-group in the wrapper (plain XLA, once),
    # so the kernel sees clean 2-D per-group weight slabs.  The inner dim of
    # wq/wk/wv (and rows of wo) is head-major, so groups are contiguous.
    wq3 = wq.reshape(DIM, G, KB).transpose(1, 0, 2)   # (G, DIM, KB)
    wk3 = wk.reshape(KV, G, KB).transpose(1, 0, 2)    # (G, KV,  KB)
    wv3 = wv.reshape(KV, G, KB).transpose(1, 0, 2)    # (G, KV,  KB)
    wo3 = wo.reshape(G, KB, DIM)                      # (G, KB,  DIM)

    kern = functools.partial(layer_attention_kernel,
                             dim_head=dim_head, head_block=head_block)

    const = lambda *shape: pl.BlockSpec(shape, lambda b, g: (0,) * len(shape))
    per_grp = lambda d0, d1: pl.BlockSpec((None, d0, d1), lambda b, g: (g, 0, 0))
    per_bat = lambda d0, d1: pl.BlockSpec((None, d0, d1), lambda b, g: (b, 0, 0))

    # Explicit scoped-VMEM budget: double-buffered pipeline blocks + scratch,
    # with headroom (clamped to stay inside v7x's 64 MiB physical VMEM).
    isz = lambda a: a.dtype.itemsize
    blk_bytes = 2 * (N1 * KV * isz(x) + N2 * DIM * isz(latents)           # x, latents
                     + 2 * KV * isz(ln1w) + 2 * DIM * isz(ln2w)           # LN params
                     + DIM * KB * isz(wq) + 2 * KV * KB * isz(wk)         # wq, wk, wv
                     + KB * DIM * isz(wo)                                 # wo
                     + N2 * DIM * isz(latents))                           # output
    scratch_bytes = (N1 * KV * isz(x) + N2 * DIM * isz(latents)
                     + N2 * KB * isz(x) + N2 * DIM * 4)
    vmem_limit = int(min(max(2 * (blk_bytes + scratch_bytes), 32 * 2 ** 20),
                         100 * 2 ** 20))

    return pl.pallas_call(
        kern,
        out_shape=jax.ShapeDtypeStruct((B, N2, DIM), latents.dtype),
        grid=(B, G),
        in_specs=[
            per_bat(N1, KV),                # x          (fetched once per b)
            per_bat(N2, DIM),               # latents    (fetched once per b)
            const(1, KV), const(1, KV),     # ln1 weight / bias
            const(1, DIM), const(1, DIM),   # ln2 weight / bias
            per_grp(DIM, KB),               # to_q  group slab
            per_grp(KV, KB),                # to_k  group slab
            per_grp(KV, KB),                # to_v  group slab
            per_grp(KB, DIM),               # to_out group slab
        ],
        out_specs=per_bat(N2, DIM),         # same block across groups -> resident
        scratch_shapes=[
            pltpu.VMEM((N1, KV), x.dtype),        # cached layernorm(x)
            pltpu.VMEM((N2, DIM), latents.dtype), # cached scaled layernorm(latents)
            pltpu.VMEM((N2, KB), x.dtype),        # per-group staged head outputs
            pltpu.VMEM((N2, DIM), jnp.float32),   # output-projection accumulator
        ],
        compiler_params=pltpu.CompilerParams(
            dimension_semantics=("parallel", "arbitrary"),
            vmem_limit_bytes=vmem_limit),
    )(x, latents, ln1w, ln1b, ln2w, ln2b, wq3, wk3, wv3, wo3)


def layer_attention_ref(x, latents, params, *, heads, dim_head):
    """Pure-JAX reference matching the PyTorch forward exactly."""
    ln1w, ln1b, ln2w, ln2b, wq, wk, wv, wo = params

    def lnorm(t, w, b, eps=1e-5):
        mu = jnp.mean(t, axis=-1, keepdims=True)
        var = jnp.mean((t - mu) ** 2, axis=-1, keepdims=True)
        return (t - mu) / jnp.sqrt(var + eps) * w[0] + b[0]

    xn = lnorm(x, ln1w, ln1b)
    ln = lnorm(latents, ln2w, ln2b)
    b, n2, _ = latents.shape
    n1 = x.shape[1]

    q = ln @ wq                                  # (b, n2, inner)
    k = xn @ wk                                  # (b, n1, inner)
    v = xn @ wv

    def split_heads(t, length):
        return t.reshape(b, length, heads, dim_head).transpose(0, 2, 1, 3)

    qh = split_heads(q, n2)
    kh = split_heads(k, n1)
    vh = split_heads(v, n1)

    scale = 1.0 / math.sqrt(math.sqrt(dim_head))
    w = jnp.einsum('bhqd,bhkd->bhqk', qh * scale, kh * scale)
    w = jax.nn.softmax(w.astype(jnp.float32), axis=-1).astype(w.dtype)
    out = jnp.einsum('bhqk,bhkd->bhqd', w, vh)
    out = out.transpose(0, 2, 1, 3).reshape(b, n2, heads * dim_head)
    return out @ wo


if __name__ == "__main__":
    # Small, forward-consistent shapes.
    B, N1, N2 = 2, 16, 8
    DIM, KV_DIM = 32, 16
    HEADS, DIM_HEAD = 4, 8
    INNER = HEADS * DIM_HEAD

    key = jax.random.PRNGKey(0)
    ks = jax.random.split(key, 10)

    x = jax.random.normal(ks[0], (B, N1, KV_DIM), jnp.float32)
    latents = jax.random.normal(ks[1], (B, N2, DIM), jnp.float32)

    # PyTorch Linear weights are (out, in); stored here pre-transposed (in, out).
    ln1w = (1.0 + 0.1 * jax.random.normal(ks[2], (1, KV_DIM), jnp.float32))
    ln1b = 0.1 * jax.random.normal(ks[3], (1, KV_DIM), jnp.float32)
    ln2w = (1.0 + 0.1 * jax.random.normal(ks[4], (1, DIM), jnp.float32))
    ln2b = 0.1 * jax.random.normal(ks[5], (1, DIM), jnp.float32)
    wq = 0.05 * jax.random.normal(ks[6], (DIM, INNER), jnp.float32)
    wkv = 0.05 * jax.random.normal(ks[7], (KV_DIM, 2 * INNER), jnp.float32)
    wk, wv = wkv[:, :INNER], wkv[:, INNER:]          # chunk(2, dim=-1) equivalent
    wo = 0.05 * jax.random.normal(ks[8], (INNER, DIM), jnp.float32)

    params = (ln1w, ln1b, ln2w, ln2b, wq, wk, wv, wo)

    out = layer_attention(x, latents, params, heads=HEADS, dim_head=DIM_HEAD)
    out = jax.block_until_ready(out)

    ref = layer_attention_ref(x, latents, params, heads=HEADS, dim_head=DIM_HEAD)
    assert out.shape == (B, N2, DIM), out.shape
    # Tolerance covers pl.reciprocal(approx=True) and the single-sided scale fold.
    assert jnp.allclose(out, ref, atol=2e-3, rtol=2e-3), \
        float(jnp.max(jnp.abs(out - ref)))

    print("KERNEL_OK")
</pallas_src>

<mosaic_0001>
module attributes {stable_mosaic.version = 11 : i64} {
  func.func @layer_attention_kernel(%arg0: i32, %arg1: i32, %arg2: memref<1x16x16xf32, #tpu.memory_space<vmem>>, %arg3: memref<1x8x32xf32, #tpu.memory_space<vmem>>, %arg4: memref<1x16xf32, #tpu.memory_space<vmem>>, %arg5: memref<1x16xf32, #tpu.memory_space<vmem>>, %arg6: memref<1x32xf32, #tpu.memory_space<vmem>>, %arg7: memref<1x32xf32, #tpu.memory_space<vmem>>, %arg8: memref<1x32x32xf32, #tpu.memory_space<vmem>>, %arg9: memref<1x16x32xf32, #tpu.memory_space<vmem>>, %arg10: memref<1x16x32xf32, #tpu.memory_space<vmem>>, %arg11: memref<1x32x32xf32, #tpu.memory_space<vmem>>, %arg12: memref<1x8x32xf32, #tpu.memory_space<vmem>>, %arg13: memref<16x16xf32, #tpu.memory_space<vmem>>, %arg14: memref<8x32xf32, #tpu.memory_space<vmem>>, %arg15: memref<8x32xf32, #tpu.memory_space<vmem>>, %arg16: memref<8x32xf32, #tpu.memory_space<vmem>>) attributes {dimension_semantics = [#tpu.dimension_semantics<parallel>, #tpu.dimension_semantics<arbitrary>], iteration_bounds = array<i64: 2, 1>, scalar_prefetch = 0 : i64, scratch_operands = 4 : i64, tpu.core_type = #tpu.core_type<tc>, window_params = [{transform_indices = @transform_0, window_bounds = array<i64: 1, 16, 16>}, {transform_indices = @transform_1, window_bounds = array<i64: 1, 8, 32>}, {pipeline_mode = #tpu.pipeline_mode<synchronous>, transform_indices = @transform_2, window_bounds = array<i64: 1, 16>}, {pipeline_mode = #tpu.pipeline_mode<synchronous>, transform_indices = @transform_3, window_bounds = array<i64: 1, 16>}, {pipeline_mode = #tpu.pipeline_mode<synchronous>, transform_indices = @transform_4, window_bounds = array<i64: 1, 32>}, {pipeline_mode = #tpu.pipeline_mode<synchronous>, transform_indices = @transform_5, window_bounds = array<i64: 1, 32>}, {transform_indices = @transform_6, window_bounds = array<i64: 1, 32, 32>}, {transform_indices = @transform_7, window_bounds = array<i64: 1, 16, 32>}, {transform_indices = @transform_8, window_bounds = array<i64: 1, 16, 32>}, {transform_indices = @transform_9, window_bounds = array<i64: 1, 32, 32>}, {transform_indices = @transform_10, window_bounds = array<i64: 1, 8, 32>}]} {
    %c0_i32 = arith.constant 0 : i32
    %0 = arith.cmpi eq, %arg1, %c0_i32 : i32
    %1 = arith.extui %0 : i1 to i32
    %c0_i32_0 = arith.constant 0 : i32
    %2 = arith.cmpi ne, %1, %c0_i32_0 : i32
    scf.if %2 {
      %c0_48 = arith.constant 0 : index
      %c0_49 = arith.constant 0 : index
      %c0_50 = arith.constant 0 : index
      %88 = vector.load %arg2[%c0_48, %c0_49, %c0_50] : memref<1x16x16xf32, #tpu.memory_space<vmem>>, vector<1x16x16xf32>
      %89 = vector.shape_cast %88 : vector<1x16x16xf32> to vector<16x16xf32>
      %c0_51 = arith.constant 0 : index
      %c0_52 = arith.constant 0 : index
      %90 = vector.load %arg4[%c0_51, %c0_52] : memref<1x16xf32, #tpu.memory_space<vmem>>, vector<1x16xf32>
      %c0_53 = arith.constant 0 : index
      %c0_54 = arith.constant 0 : index
      %91 = vector.load %arg5[%c0_53, %c0_54] : memref<1x16xf32, #tpu.memory_space<vmem>>, vector<1x16xf32>
      %cst_55 = arith.constant dense<0.000000e+00> : vector<16xf32>
      %92 = vector.multi_reduction <add>, %89, %cst_55 [1] : vector<16x16xf32> to vector<16xf32>
      %93 = vector.shape_cast %92 : vector<16xf32> to vector<16x1xf32>
      %cst_56 = arith.constant 1.600000e+01 : f32
      %94 = vector.broadcast %cst_56 : f32 to vector<16x1xf32>
      %95 = arith.divf %93, %94 : vector<16x1xf32>
      %96 = vector.broadcast %95 : vector<16x1xf32> to vector<16x16xf32>
      %97 = arith.subf %89, %96 : vector<16x16xf32>
      %98 = arith.mulf %97, %97 : vector<16x16xf32>
      %cst_57 = arith.constant dense<0.000000e+00> : vector<16xf32>
      %99 = vector.multi_reduction <add>, %98, %cst_57 [1] : vector<16x16xf32> to vector<16xf32>
      %100 = vector.shape_cast %99 : vector<16xf32> to vector<16x1xf32>
      %cst_58 = arith.constant 1.600000e+01 : f32
      %101 = vector.broadcast %cst_58 : f32 to vector<16x1xf32>
      %102 = arith.divf %100, %101 : vector<16x1xf32>
      %103 = vector.broadcast %95 : vector<16x1xf32> to vector<16x16xf32>
      %104 = arith.subf %89, %103 : vector<16x16xf32>
      %cst_59 = arith.constant 9.99999974E-6 : f32
      %105 = vector.broadcast %cst_59 : f32 to vector<16x1xf32>
      %106 = arith.addf %102, %105 : vector<16x1xf32>
      %107 = math.rsqrt %106 : vector<16x1xf32>
      %108 = vector.broadcast %107 : vector<16x1xf32> to vector<16x16xf32>
      %109 = arith.mulf %104, %108 : vector<16x16xf32>
      %110 = vector.broadcast %90 : vector<1x16xf32> to vector<16x16xf32>
      %111 = arith.mulf %109, %110 : vector<16x16xf32>
      %112 = vector.broadcast %91 : vector<1x16xf32> to vector<16x16xf32>
      %113 = arith.addf %111, %112 : vector<16x16xf32>
      %c0_60 = arith.constant 0 : index
      %c0_61 = arith.constant 0 : index
      %114 = vector.load %arg13[%c0_60, %c0_61] : memref<16x16xf32, #tpu.memory_space<vmem>>, vector<16x16xf32>
      tpu.vector_store %arg13[%c0_60, %c0_61], %113 {strides = array<i32>} : memref<16x16xf32, #tpu.memory_space<vmem>>, vector<16x16xf32>,
      %c0_62 = arith.constant 0 : index
      %c0_63 = arith.constant 0 : index
      %c0_64 = arith.constant 0 : index
      %115 = vector.load %arg3[%c0_62, %c0_63, %c0_64] : memref<1x8x32xf32, #tpu.memory_space<vmem>>, vector<1x8x32xf32>
      %116 = vector.shape_cast %115 : vector<1x8x32xf32> to vector<8x32xf32>
      %c0_65 = arith.constant 0 : index
      %c0_66 = arith.constant 0 : index
      %117 = vector.load %arg6[%c0_65, %c0_66] : memref<1x32xf32, #tpu.memory_space<vmem>>, vector<1x32xf32>
      %c0_67 = arith.constant 0 : index
      %c0_68 = arith.constant 0 : index
      %118 = vector.load %arg7[%c0_67, %c0_68] : memref<1x32xf32, #tpu.memory_space<vmem>>, vector<1x32xf32>
      %cst_69 = arith.constant dense<0.000000e+00> : vector<8xf32>
      %119 = vector.multi_reduction <add>, %116, %cst_69 [1] : vector<8x32xf32> to vector<8xf32>
      %120 = vector.shape_cast %119 : vector<8xf32> to vector<8x1xf32>
      %cst_70 = arith.constant 3.200000e+01 : f32
      %121 = vector.broadcast %cst_70 : f32 to vector<8x1xf32>
      %122 = arith.divf %120, %121 : vector<8x1xf32>
      %123 = vector.broadcast %122 : vector<8x1xf32> to vector<8x32xf32>
      %124 = arith.subf %116, %123 : vector<8x32xf32>
      %125 = arith.mulf %124, %124 : vector<8x32xf32>
      %cst_71 = arith.constant dense<0.000000e+00> : vector<8xf32>
      %126 = vector.multi_reduction <add>, %125, %cst_71 [1] : vector<8x32xf32> to vector<8xf32>
      %127 = vector.shape_cast %126 : vector<8xf32> to vector<8x1xf32>
      %cst_72 = arith.constant 3.200000e+01 : f32
      %128 = vector.broadcast %cst_72 : f32 to vector<8x1xf32>
      %129 = arith.divf %127, %128 : vector<8x1xf32>
      %130 = vector.broadcast %122 : vector<8x1xf32> to vector<8x32xf32>
      %131 = arith.subf %116, %130 : vector<8x32xf32>
      %cst_73 = arith.constant 9.99999974E-6 : f32
      %132 = vector.broadcast %cst_73 : f32 to vector<8x1xf32>
      %133 = arith.addf %129, %132 : vector<8x1xf32>
      %134 = math.rsqrt %133 : vector<8x1xf32>
      %135 = vector.broadcast %134 : vector<8x1xf32> to vector<8x32xf32>
      %136 = arith.mulf %131, %135 : vector<8x32xf32>
      %137 = vector.broadcast %117 : vector<1x32xf32> to vector<8x32xf32>
      %138 = arith.mulf %136, %137 : vector<8x32xf32>
      %139 = vector.broadcast %118 : vector<1x32xf32> to vector<8x32xf32>
      %140 = arith.addf %138, %139 : vector<8x32xf32>
      %cst_74 = arith.constant 0.353553385 : f32
      %141 = vector.broadcast %cst_74 : f32 to vector<8x32xf32>
      %142 = arith.mulf %140, %141 : vector<8x32xf32>
      %c0_75 = arith.constant 0 : index
      %c0_76 = arith.constant 0 : index
      %143 = vector.load %arg14[%c0_75, %c0_76] : memref<8x32xf32, #tpu.memory_space<vmem>>, vector<8x32xf32>
      tpu.vector_store %arg14[%c0_75, %c0_76], %142 {strides = array<i32>} : memref<8x32xf32, #tpu.memory_space<vmem>>, vector<8x32xf32>,
      %cst_77 = arith.constant 0.000000e+00 : f32
      %144 = vector.broadcast %cst_77 : f32 to vector<8x32xf32>
      %c0_78 = arith.constant 0 : index
      %c0_79 = arith.constant 0 : index
      %145 = vector.load %arg16[%c0_78, %c0_79] : memref<8x32xf32, #tpu.memory_space<vmem>>, vector<8x32xf32>
      tpu.vector_store %arg16[%c0_78, %c0_79], %144 {strides = array<i32>} : memref<8x32xf32, #tpu.memory_space<vmem>>, vector<8x32xf32>,
    } else {
    }
    %c0 = arith.constant 0 : index
    %c0_1 = arith.constant 0 : index
    %3 = vector.load %arg13[%c0, %c0_1] : memref<16x16xf32, #tpu.memory_space<vmem>>, vector<16x16xf32>
    %c0_2 = arith.constant 0 : index
    %c0_3 = arith.constant 0 : index
    %4 = vector.load %arg14[%c0_2, %c0_3] : memref<8x32xf32, #tpu.memory_space<vmem>>, vector<8x32xf32>
    %c0_4 = arith.constant 0 : index
    %c0_5 = arith.constant 0 : index
    %c0_6 = arith.constant 0 : index
    %5 = vector.load %arg8[%c0_4, %c0_5, %c0_6] : memref<1x32x32xf32, #tpu.memory_space<vmem>>, vector<1x32x32xf32>
    %6 = vector.shape_cast %5 : vector<1x32x32xf32> to vector<32x32xf32>
    %cst = arith.constant dense<0.000000e+00> : vector<8x32xf32>
    %7 = tpu.matmul %4, %6, %cst {dimension_numbers = #tpu.dot_dimension_numbers<[1], [0], [0], [1], [0, 0, 1, 1], [], []>} : vector<8x32xf32>, vector<32x32xf32>, vector<8x32xf32> -> vector<8x32xf32>
    %c0_7 = arith.constant 0 : index
    %c0_8 = arith.constant 0 : index
    %c0_9 = arith.constant 0 : index
    %8 = vector.load %arg9[%c0_7, %c0_8, %c0_9] : memref<1x16x32xf32, #tpu.memory_space<vmem>>, vector<1x16x32xf32>
    %9 = vector.shape_cast %8 : vector<1x16x32xf32> to vector<16x32xf32>
    %cst_10 = arith.constant dense<0.000000e+00> : vector<16x32xf32>
    %10 = tpu.matmul %3, %9, %cst_10 {dimension_numbers = #tpu.dot_dimension_numbers<[1], [0], [0], [1], [0, 0, 1, 1], [], []>} : vector<16x16xf32>, vector<16x32xf32>, vector<16x32xf32> -> vector<16x32xf32>
    %c0_11 = arith.constant 0 : index
    %c0_12 = arith.constant 0 : index
    %c0_13 = arith.constant 0 : index
    %11 = vector.load %arg10[%c0_11, %c0_12, %c0_13] : memref<1x16x32xf32, #tpu.memory_space<vmem>>, vector<1x16x32xf32>
    %12 = vector.shape_cast %11 : vector<1x16x32xf32> to vector<16x32xf32>
    %cst_14 = arith.constant dense<0.000000e+00> : vector<16x32xf32>
    %13 = tpu.matmul %3, %12, %cst_14 {dimension_numbers = #tpu.dot_dimension_numbers<[1], [0], [0], [1], [0, 0, 1, 1], [], []>} : vector<16x16xf32>, vector<16x32xf32>, vector<16x32xf32> -> vector<16x32xf32>
    %14 = vector.extract_strided_slice %7 {offsets = [0, 0], sizes = [8, 8], strides = [1, 1]} : vector<8x32xf32> to vector<8x8xf32>
    %15 = vector.extract_strided_slice %10 {offsets = [0, 0], sizes = [16, 8], strides = [1, 1]} : vector<16x32xf32> to vector<16x8xf32>
    %cst_15 = arith.constant dense<0.000000e+00> : vector<8x16xf32>
    %16 = tpu.matmul %14, %15, %cst_15 {dimension_numbers = #tpu.dot_dimension_numbers<[1], [1], [0], [0], [0, 0, 1, 0], [], []>} : vector<8x8xf32>, vector<16x8xf32>, vector<8x16xf32> -> vector<8x16xf32>
    %cst_16 = arith.constant dense<0xFF800000> : vector<8xf32>
    %17 = vector.multi_reduction <maximumf>, %16, %cst_16 [1] : vector<8x16xf32> to vector<8xf32>
    %18 = vector.shape_cast %17 : vector<8xf32> to vector<8x1xf32>
    %19 = vector.broadcast %18 : vector<8x1xf32> to vector<8x16xf32>
    %20 = arith.subf %16, %19 : vector<8x16xf32>
    %21 = math.exp %20 : vector<8x16xf32>
    %cst_17 = arith.constant dense<0.000000e+00> : vector<8xf32>
    %22 = vector.multi_reduction <add>, %21, %cst_17 [1] : vector<8x16xf32> to vector<8xf32>
    %23 = vector.shape_cast %22 : vector<8xf32> to vector<8x1xf32>
    %24 = vector.extract_strided_slice %13 {offsets = [0, 0], sizes = [16, 8], strides = [1, 1]} : vector<16x32xf32> to vector<16x8xf32>
    %cst_18 = arith.constant dense<0.000000e+00> : vector<8x8xf32>
    %25 = tpu.matmul %21, %24, %cst_18 {dimension_numbers = #tpu.dot_dimension_numbers<[1], [0], [0], [1], [0, 0, 1, 1], [], []>} : vector<8x16xf32>, vector<16x8xf32>, vector<8x8xf32> -> vector<8x8xf32>
    %26 = tpu.reciprocal %23 {approx = true} : vector<8x1xf32> -> vector<8x1xf32>
    %27 = vector.broadcast %26 : vector<8x1xf32> to vector<8x8xf32>
    %28 = arith.mulf %25, %27 : vector<8x8xf32>
    %c0_19 = arith.constant 0 : index
    %c0_20 = arith.constant 0 : index
    %29 = vector.load %arg15[%c0_19, %c0_20] : memref<8x32xf32, #tpu.memory_space<vmem>>, vector<8x8xf32>
    tpu.vector_store %arg15[%c0_19, %c0_20], %28 {strides = array<i32>} : memref<8x32xf32, #tpu.memory_space<vmem>>, vector<8x8xf32>,
    %30 = vector.extract_strided_slice %7 {offsets = [0, 8], sizes = [8, 8], strides = [1, 1]} : vector<8x32xf32> to vector<8x8xf32>
    %31 = vector.extract_strided_slice %10 {offsets = [0, 8], sizes = [16, 8], strides = [1, 1]} : vector<16x32xf32> to vector<16x8xf32>
    %cst_21 = arith.constant dense<0.000000e+00> : vector<8x16xf32>
    %32 = tpu.matmul %30, %31, %cst_21 {dimension_numbers = #tpu.dot_dimension_numbers<[1], [1], [0], [0], [0, 0, 1, 0], [], []>} : vector<8x8xf32>, vector<16x8xf32>, vector<8x16xf32> -> vector<8x16xf32>
    %cst_22 = arith.constant dense<0xFF800000> : vector<8xf32>
    %33 = vector.multi_reduction <maximumf>, %32, %cst_22 [1] : vector<8x16xf32> to vector<8xf32>
    %34 = vector.shape_cast %33 : vector<8xf32> to vector<8x1xf32>
    %35 = vector.broadcast %34 : vector<8x1xf32> to vector<8x16xf32>
    %36 = arith.subf %32, %35 : vector<8x16xf32>
    %37 = math.exp %36 : vector<8x16xf32>
    %cst_23 = arith.constant dense<0.000000e+00> : vector<8xf32>
    %38 = vector.multi_reduction <add>, %37, %cst_23 [1] : vector<8x16xf32> to vector<8xf32>
    %39 = vector.shape_cast %38 : vector<8xf32> to vector<8x1xf32>
    %40 = vector.extract_strided_slice %13 {offsets = [0, 8], sizes = [16, 8], strides = [1, 1]} : vector<16x32xf32> to vector<16x8xf32>
    %cst_24 = arith.constant dense<0.000000e+00> : vector<8x8xf32>
    %41 = tpu.matmul %37, %40, %cst_24 {dimension_numbers = #tpu.dot_dimension_numbers<[1], [0], [0], [1], [0, 0, 1, 1], [], []>} : vector<8x16xf32>, vector<16x8xf32>, vector<8x8xf32> -> vector<8x8xf32>
    %42 = tpu.reciprocal %39 {approx = true} : vector<8x1xf32> -> vector<8x1xf32>
    %43 = vector.broadcast %42 : vector<8x1xf32> to vector<8x8xf32>
    %44 = arith.mulf %41, %43 : vector<8x8xf32>
    %c0_25 = arith.constant 0 : index
    %c8 = arith.constant 8 : index
    %45 = vector.load %arg15[%c0_25, %c8] : memref<8x32xf32, #tpu.memory_space<vmem>>, vector<8x8xf32>
    tpu.vector_store %arg15[%c0_25, %c8], %44 {strides = array<i32>} : memref<8x32xf32, #tpu.memory_space<vmem>>, vector<8x8xf32>,
    %46 = vector.extract_strided_slice %7 {offsets = [0, 16], sizes = [8, 8], strides = [1, 1]} : vector<8x32xf32> to vector<8x8xf32>
    %47 = vector.extract_strided_slice %10 {offsets = [0, 16], sizes = [16, 8], strides = [1, 1]} : vector<16x32xf32> to vector<16x8xf32>
    %cst_26 = arith.constant dense<0.000000e+00> : vector<8x16xf32>
    %48 = tpu.matmul %46, %47, %cst_26 {dimension_numbers = #tpu.dot_dimension_numbers<[1], [1], [0], [0], [0, 0, 1, 0], [], []>} : vector<8x8xf32>, vector<16x8xf32>, vector<8x16xf32> -> vector<8x16xf32>
    %cst_27 = arith.constant dense<0xFF800000> : vector<8xf32>
    %49 = vector.multi_reduction <maximumf>, %48, %cst_27 [1] : vector<8x16xf32> to vector<8xf32>
    %50 = vector.shape_cast %49 : vector<8xf32> to vector<8x1xf32>
    %51 = vector.broadcast %50 : vector<8x1xf32> to vector<8x16xf32>
    %52 = arith.subf %48, %51 : vector<8x16xf32>
    %53 = math.exp %52 : vector<8x16xf32>
    %cst_28 = arith.constant dense<0.000000e+00> : vector<8xf32>
    %54 = vector.multi_reduction <add>, %53, %cst_28 [1] : vector<8x16xf32> to vector<8xf32>
    %55 = vector.shape_cast %54 : vector<8xf32> to vector<8x1xf32>
    %56 = vector.extract_strided_slice %13 {offsets = [0, 16], sizes = [16, 8], strides = [1, 1]} : vector<16x32xf32> to vector<16x8xf32>
    %cst_29 = arith.constant dense<0.000000e+00> : vector<8x8xf32>
    %57 = tpu.matmul %53, %56, %cst_29 {dimension_numbers = #tpu.dot_dimension_numbers<[1], [0], [0], [1], [0, 0, 1, 1], [], []>} : vector<8x16xf32>, vector<16x8xf32>, vector<8x8xf32> -> vector<8x8xf32>
    %58 = tpu.reciprocal %55 {approx = true} : vector<8x1xf32> -> vector<8x1xf32>
    %59 = vector.broadcast %58 : vector<8x1xf32> to vector<8x8xf32>
    %60 = arith.mulf %57, %59 : vector<8x8xf32>
    %c0_30 = arith.constant 0 : index
    %c16 = arith.constant 16 : index
    %61 = vector.load %arg15[%c0_30, %c16] : memref<8x32xf32, #tpu.memory_space<vmem>>, vector<8x8xf32>
    tpu.vector_store %arg15[%c0_30, %c16], %60 {strides = array<i32>} : memref<8x32xf32, #tpu.memory_space<vmem>>, vector<8x8xf32>,
    %62 = vector.extract_strided_slice %7 {offsets = [0, 24], sizes = [8, 8], strides = [1, 1]} : vector<8x32xf32> to vector<8x8xf32>
    %63 = vector.extract_strided_slice %10 {offsets = [0, 24], sizes = [16, 8], strides = [1, 1]} : vector<16x32xf32> to vector<16x8xf32>
    %cst_31 = arith.constant dense<0.000000e+00> : vector<8x16xf32>
    %64 = tpu.matmul %62, %63, %cst_31 {dimension_numbers = #tpu.dot_dimension_numbers<[1], [1], [0], [0], [0, 0, 1, 0], [], []>} : vector<8x8xf32>, vector<16x8xf32>, vector<8x16xf32> -> vector<8x16xf32>
    %cst_32 = arith.constant dense<0xFF800000> : vector<8xf32>
    %65 = vector.multi_reduction <maximumf>, %64, %cst_32 [1] : vector<8x16xf32> to vector<8xf32>
    %66 = vector.shape_cast %65 : vector<8xf32> to vector<8x1xf32>
    %67 = vector.broadcast %66 : vector<8x1xf32> to vector<8x16xf32>
    %68 = arith.subf %64, %67 : vector<8x16xf32>
    %69 = math.exp %68 : vector<8x16xf32>
    %cst_33 = arith.constant dense<0.000000e+00> : vector<8xf32>
    %70 = vector.multi_reduction <add>, %69, %cst_33 [1] : vector<8x16xf32> to vector<8xf32>
    %71 = vector.shape_cast %70 : vector<8xf32> to vector<8x1xf32>
    %72 = vector.extract_strided_slice %13 {offsets = [0, 24], sizes = [16, 8], strides = [1, 1]} : vector<16x32xf32> to vector<16x8xf32>
    %cst_34 = arith.constant dense<0.000000e+00> : vector<8x8xf32>
    %73 = tpu.matmul %69, %72, %cst_34 {dimension_numbers = #tpu.dot_dimension_numbers<[1], [0], [0], [1], [0, 0, 1, 1], [], []>} : vector<8x16xf32>, vector<16x8xf32>, vector<8x8xf32> -> vector<8x8xf32>
    %74 = tpu.reciprocal %71 {approx = true} : vector<8x1xf32> -> vector<8x1xf32>
    %75 = vector.broadcast %74 : vector<8x1xf32> to vector<8x8xf32>
    %76 = arith.mulf %73, %75 : vector<8x8xf32>
    %c0_35 = arith.constant 0 : index
    %c24 = arith.constant 24 : index
    %77 = vector.load %arg15[%c0_35, %c24] : memref<8x32xf32, #tpu.memory_space<vmem>>, vector<8x8xf32>
    tpu.vector_store %arg15[%c0_35, %c24], %76 {strides = array<i32>} : memref<8x32xf32, #tpu.memory_space<vmem>>, vector<8x8xf32>,
    %c0_36 = arith.constant 0 : index
    %c0_37 = arith.constant 0 : index
    %78 = vector.load %arg16[%c0_36, %c0_37] : memref<8x32xf32, #tpu.memory_space<vmem>>, vector<8x32xf32>
    %c0_38 = arith.constant 0 : index
    %c0_39 = arith.constant 0 : index
    %79 = vector.load %arg15[%c0_38, %c0_39] : memref<8x32xf32, #tpu.memory_space<vmem>>, vector<8x32xf32>
    %c0_40 = arith.constant 0 : index
    %c0_41 = arith.constant 0 : index
    %c0_42 = arith.constant 0 : index
    %80 = vector.load %arg11[%c0_40, %c0_41, %c0_42] : memref<1x32x32xf32, #tpu.memory_space<vmem>>, vector<1x32x32xf32>
    %81 = vector.shape_cast %80 : vector<1x32x32xf32> to vector<32x32xf32>
    %cst_43 = arith.constant dense<0.000000e+00> : vector<8x32xf32>
    %82 = tpu.matmul %79, %81, %cst_43 {dimension_numbers = #tpu.dot_dimension_numbers<[1], [0], [0], [1], [0, 0, 1, 1], [], []>} : vector<8x32xf32>, vector<32x32xf32>, vector<8x32xf32> -> vector<8x32xf32>
    %83 = arith.addf %78, %82 : vector<8x32xf32>
    %c0_44 = arith.constant 0 : index
    %c0_45 = arith.constant 0 : index
    %84 = vector.load %arg16[%c0_44, %c0_45] : memref<8x32xf32, #tpu.memory_space<vmem>>, vector<8x32xf32>
    tpu.vector_store %arg16[%c0_44, %c0_45], %83 {strides = array<i32>} : memref<8x32xf32, #tpu.memory_space<vmem>>, vector<8x32xf32>,
    %c0_i32_46 = arith.constant 0 : i32
    %85 = arith.cmpi eq, %arg1, %c0_i32_46 : i32
    %86 = arith.extui %85 : i1 to i32
    %c0_i32_47 = arith.constant 0 : i32
    %87 = arith.cmpi ne, %86, %c0_i32_47 : i32
    scf.if %87 {
      %c0_48 = arith.constant 0 : index
      %c0_49 = arith.constant 0 : index
      %88 = vector.load %arg16[%c0_48, %c0_49] : memref<8x32xf32, #tpu.memory_space<vmem>>, vector<8x32xf32>
      %c0_50 = arith.constant 0 : index
      %c0_51 = arith.constant 0 : index
      %c0_52 = arith.constant 0 : index
      %89 = vector.load %arg12[%c0_50, %c0_51, %c0_52] : memref<1x8x32xf32, #tpu.memory_space<vmem>>, vector<1x8x32xf32>
      %90 = vector.shape_cast %89 : vector<1x8x32xf32> to vector<8x32xf32>
      %91 = vector.shape_cast %88 : vector<8x32xf32> to vector<1x8x32xf32>
      tpu.vector_store %arg12[%c0_50, %c0_51, %c0_52], %91 {strides = array<i32>} : memref<1x8x32xf32, #tpu.memory_space<vmem>>, vector<1x8x32xf32>,
    } else {
    }
    return
  }
  func.func @transform_0(%arg0: i32, %arg1: i32) -> (i32, i32, i32) {
    %c0_i32 = arith.constant 0 : i32
    %c0_i32_0 = arith.constant 0 : i32
    %c0_i32_1 = arith.constant 0 : i32
    return %arg0, %c0_i32, %c0_i32_0 : i32, i32, i32
  }
  func.func @transform_1(%arg0: i32, %arg1: i32) -> (i32, i32, i32) {
    %c0_i32 = arith.constant 0 : i32
    %c0_i32_0 = arith.constant 0 : i32
    %c0_i32_1 = arith.constant 0 : i32
    return %arg0, %c0_i32, %c0_i32_0 : i32, i32, i32
  }
  func.func @transform_2(%arg0: i32, %arg1: i32) -> (i32, i32) {
    %c0_i32 = arith.constant 0 : i32
    %c0_i32_0 = arith.constant 0 : i32
    %c0_i32_1 = arith.constant 0 : i32
    return %c0_i32, %c0_i32_0 : i32, i32
  }
  func.func @transform_3(%arg0: i32, %arg1: i32) -> (i32, i32) {
    %c0_i32 = arith.constant 0 : i32
    %c0_i32_0 = arith.constant 0 : i32
    %c0_i32_1 = arith.constant 0 : i32
    return %c0_i32, %c0_i32_0 : i32, i32
  }
  func.func @transform_4(%arg0: i32, %arg1: i32) -> (i32, i32) {
    %c0_i32 = arith.constant 0 : i32
    %c0_i32_0 = arith.constant 0 : i32
    %c0_i32_1 = arith.constant 0 : i32
    return %c0_i32, %c0_i32_0 : i32, i32
  }
  func.func @transform_5(%arg0: i32, %arg1: i32) -> (i32, i32) {
    %c0_i32 = arith.constant 0 : i32
    %c0_i32_0 = arith.constant 0 : i32
    %c0_i32_1 = arith.constant 0 : i32
    return %c0_i32, %c0_i32_0 : i32, i32
  }
  func.func @transform_6(%arg0: i32, %arg1: i32) -> (i32, i32, i32) {
    %c0_i32 = arith.constant 0 : i32
    %c0_i32_0 = arith.constant 0 : i32
    %c0_i32_1 = arith.constant 0 : i32
    return %arg1, %c0_i32, %c0_i32_0 : i32, i32, i32
  }
  func.func @transform_7(%arg0: i32, %arg1: i32) -> (i32, i32, i32) {
    %c0_i32 = arith.constant 0 : i32
    %c0_i32_0 = arith.constant 0 : i32
    %c0_i32_1 = arith.constant 0 : i32
    return %arg1, %c0_i32, %c0_i32_0 : i32, i32, i32
  }
  func.func @transform_8(%arg0: i32, %arg1: i32) -> (i32, i32, i32) {
    %c0_i32 = arith.constant 0 : i32
    %c0_i32_0 = arith.constant 0 : i32
    %c0_i32_1 = arith.constant 0 : i32
    return %arg1, %c0_i32, %c0_i32_0 : i32, i32, i32
  }
  func.func @transform_9(%arg0: i32, %arg1: i32) -> (i32, i32, i32) {
    %c0_i32 = arith.constant 0 : i32
    %c0_i32_0 = arith.constant 0 : i32
    %c0_i32_1 = arith.constant 0 : i32
    return %arg1, %c0_i32, %c0_i32_0 : i32, i32, i32
  }
  func.func @transform_10(%arg0: i32, %arg1: i32) -> (i32, i32, i32) {
    %c0_i32 = arith.constant 0 : i32
    %c0_i32_0 = arith.constant 0 : i32
    %c0_i32_1 = arith.constant 0 : i32
    return %arg0, %c0_i32, %c0_i32_0 : i32, i32, i32
  }
}

</mosaic_0001>

<llo_original>
// kernel: tpu_custom_call.1
$region0: #{tpu_custom_call.1}
  #allocation0 [shape = 'u32[]', space=smem, size = 0x4, offset = 0x4, fixed_abs, tag = 'smem constant byte address 0x4 - core index']
  #allocation1 [shape = 'u32[144,128]{1,0:T(1,128)}', space=vmem, size = 0x12000, scoped, tag = 'internal scratch']
  #allocation2 [shape = 'f32[16,16]{1,0:T(8,128)}', space=vmem, size = 0x2000, scoped, tag = 'scratch operand']
  #allocation3 [shape = 'f32[8,32]{1,0:T(8,128)}', space=vmem, size = 0x1000, scoped, tag = 'scratch operand']
  #allocation4 [shape = 'f32[8,32]{1,0:T(8,128)}', space=vmem, size = 0x1000, scoped, tag = 'scratch operand']
  #allocation5 [shape = 'f32[8,32]{1,0:T(8,128)}', space=vmem, size = 0x1000, scoped, tag = 'scratch operand']
  %s0 = inlined_call_operand.hbm [shape: f32[2,16,16], index: 0, kind: input, shape index: {}]
  %s1 = inlined_call_operand.hbm [shape: f32[2,8,32], index: 1, kind: input, shape index: {}]
  %s2 = inlined_call_operand.vmem [shape: f32[1,16], index: 2, kind: input, shape index: {}]
  %s3 = inlined_call_operand.vmem [shape: f32[1,16], index: 3, kind: input, shape index: {}]
  %s4 = inlined_call_operand.vmem [shape: f32[1,32], index: 4, kind: input, shape index: {}]
  %s5 = inlined_call_operand.vmem [shape: f32[1,32], index: 5, kind: input, shape index: {}]
  %s6 = inlined_call_operand.hbm [shape: f32[1,32,32], index: 6, kind: input, shape index: {}]
  %s7 = inlined_call_operand.hbm [shape: f32[1,16,32], index: 7, kind: input, shape index: {}]
  %s8 = inlined_call_operand.hbm [shape: f32[1,16,32], index: 8, kind: input, shape index: {}]
  %s9 = inlined_call_operand.hbm [shape: f32[1,32,32], index: 9, kind: input, shape index: {}]
  %s10 = inlined_call_operand.hbm [shape: f32[2,8,32], index: 10, kind: output, shape index: {}]
  %s11 = sld [smem:[#allocation0]]
  $region105: #{tpu_custom_call.1} parent=0
    _
  %s13 = ssub.s32 1, %s11
  %s14 = scalar_select 0, %s13, %s11
  $region1: #{tpu_custom_call.1} parent=0
    #allocation6 [shape = 'u8[16384]{0}', space=vmem, size = 0x4000, scoped, tag = 'input window, operand 0']
    #allocation7 [shape = 's32[2]{0}', space=sflag, size = 0x8, scoped, tag = 'scoped memory for tpu_custom_call.1']
    #allocation8 [shape = 's32[2]{0}', space=sflag, size = 0x8, scoped, tag = 'scoped memory for tpu_custom_call.1']
    #allocation9 [shape = 'u8[8192]{0}', space=vmem, size = 0x2000, scoped, tag = 'input window, operand 1']
    #allocation10 [shape = 's32[2]{0}', space=sflag, size = 0x8, scoped, tag = 'scoped memory for tpu_custom_call.1']
    #allocation11 [shape = 'u8[16384]{0}', space=vmem, size = 0x4000, scoped, tag = 'input window, operand 6, single buffered']
    #allocation12 [shape = 'u8[8192]{0}', space=vmem, size = 0x2000, scoped, tag = 'input window, operand 7, single buffered']
    #allocation13 [shape = 's32[1]{0}', space=sflag, size = 0x4, scoped, tag = 'scoped memory for tpu_custom_call.1']
    #allocation14 [shape = 'u8[8192]{0}', space=vmem, size = 0x2000, scoped, tag = 'input window, operand 8, single buffered']
    #allocation15 [shape = 'u8[16384]{0}', space=vmem, size = 0x4000, scoped, tag = 'input window, operand 9, single buffered']
    #allocation16 [shape = 's32[1]{0}', space=sflag, size = 0x4, scoped, tag = 'scoped memory for tpu_custom_call.1']
    #allocation17 [shape = 'u8[8192]{0}', space=vmem, size = 0x2000, scoped, tag = 'output window, operand 0']
    %15 = vsyncpa [#allocation7], 0
    %s16 = scalar_lea.sflag [#allocation7], 1
    %17 = vsyncpa %s16, 0
    %18 = vsyncpa [#allocation10], 0
    %s19 = scalar_lea.sflag [#allocation10], 1
    %20 = vsyncpa %s19, 0
    %21 = vsyncpa [#allocation13], 0
    %22 = vsyncpa [#allocation16], 0
    %23 = vsyncpa [#allocation8], 0
    %s24 = scalar_lea.sflag [#allocation8], 1
    %25 = vsyncpa %s24, 0
    loop: start=0, step=1, limit=4
    $region2: #{tpu_custom_call.1} parent=1 // loop_pre_header
      _
    $region3: #{tpu_custom_call.1} parent=1 // loop_header
      %s27 = sphi 0, %s31
      %p28 = scmp.ge.s32.totalorder %s27, 4
      %s34 = sphi 0, %s46
      %s35 = sphi 0, %s42
      %s36 = sphi 0, %s34
      %s37 = sphi 0, %s35
      %s38 = sphi 0, %s36
      %s39 = sphi 0, %s37
      %s49 = sphi 0, %s51
      %s52 = sphi 0, %s49
      %s53 = sphi 0, %s52
      %s69 = sphi 0, %s53
      %s75 = sphi 0, %s77
      %s78 = sphi 0, %s75
      %s79 = sphi 0, %s78
      %s95 = sphi 0, %s79
      %s99 = sphi 0, %s99
      %s101 = sphi 0, %s99
      %s102 = sphi 0, %s101
      %s116 = sphi 0, %s102
      %s120 = sphi 0, %s120
      %s122 = sphi 0, %s120
      %s123 = sphi 0, %s122
      %s137 = sphi 0, %s123
      %s141 = sphi 0, %s141
      %s143 = sphi 0, %s141
      %s144 = sphi 0, %s143
      %s158 = sphi 0, %s144
      %s162 = sphi 0, %s162
      %s164 = sphi 0, %s162
      %s165 = sphi 0, %s164
      %s179 = sphi 0, %s165
      %s185 = sphi 0, %s187
      %s188 = sphi 0, %s185
      %s189 = sphi 0, %s188
      %s205 = sphi 0, %s189
      %s211 = sphi 0, %s213
      %s214 = sphi 0, %s211
      %s215 = sphi 0, %s214
      %s231 = sphi 0, %s215
      %s237 = sphi 0, %s239
      %s240 = sphi 0, %s237
      %s241 = sphi 0, %s240
      %s257 = sphi 0, %s241
      %s263 = sphi 0, %s265
      %s266 = sphi 0, %s263
      %s267 = sphi 0, %s266
      %s283 = sphi 0, %s267
      %s289 = sphi 0, %s291
      %s292 = sphi 0, %s289
      %s293 = sphi 0, %s292
      %s309 = sphi 0, %s293
    $region4: #{tpu_custom_call.1} parent=1 // loop_header_branch
      %30 = sbr.rel (%p28) target = $region8
    $region5: #{tpu_custom_call.1} parent=1 // loop_body
      %s32 = ssub.s32 %s27, 1
      %s33 = ssub.s32 %s27, 2
      %s40 = sadd.s32 1, %s35
      %p41 = scmp.ge.s32.totalorder %s40, 1
      %s42 = scalar_select %p41, 0, %s40
      %s43 = sadd.s32 1, %s34
      %s44 = scalar_select %p41, %s43, %s34
      %p45 = scmp.ge.s32.totalorder %s44, 2
      %s46 = scalar_select %p45, 0, %s44
      %s47 = ssub.s32 %s34, %s46
      %p48 = scmp.eq.s32.totalorder %s47, 0
      %s50 = sadd.s32 %s49, 1
      %s51 = scalar_select %p48, %s49, %s50
      %p54 = pneg %p48
      %p55 = scmp.eq.s32.totalorder %s27, 1
      %p56 = por %p54, %p55
      %p57 = scmp.ne.s32.totalorder %s49, %s52
      %p58 = scmp.eq.s32.totalorder %s27, 0
      %p59 = por %p57, %p58
      %p60 = scmp.ne.s32.totalorder %s49, %s52
      %p61 = scmp.eq.s32.totalorder %s32, 1
      %p62 = por %p60, %p61
      %p63 = scmp.ne.s32.totalorder %s52, %s53
      %p64 = scmp.eq.s32.totalorder %s32, 0
      %p65 = por %p63, %p64
      %p66 = scmp.ne.s32.totalorder %s52, %s53
      %p67 = scmp.eq.s32.totalorder %s33, 1
      %p68 = por %p66, %p67
      %p70 = scmp.ne.s32.totalorder %s53, %s69
      %p71 = scmp.eq.s32.totalorder %s33, 0
      %p72 = por %p70, %p71
      %s73 = ssub.s32 %s34, %s46
      %p74 = scmp.eq.s32.totalorder %s73, 0
      %s76 = sadd.s32 %s75, 1
      %s77 = scalar_select %p74, %s75, %s76
      %p80 = pneg %p74
      %p81 = scmp.eq.s32.totalorder %s27, 1
      %p82 = por %p80, %p81
      %p83 = scmp.ne.s32.totalorder %s75, %s78
      %p84 = scmp.eq.s32.totalorder %s27, 0
      %p85 = por %p83, %p84
      %p86 = scmp.ne.s32.totalorder %s75, %s78
      %p87 = scmp.eq.s32.totalorder %s32, 1
      %p88 = por %p86, %p87
      %p89 = scmp.ne.s32.totalorder %s78, %s79
      %p90 = scmp.eq.s32.totalorder %s32, 0
      %p91 = por %p89, %p90
      %p92 = scmp.ne.s32.totalorder %s78, %s79
      %p93 = scmp.eq.s32.totalorder %s33, 1
      %p94 = por %p92, %p93
      %p96 = scmp.ne.s32.totalorder %s79, %s95
      %p97 = scmp.eq.s32.totalorder %s33, 0
      %p98 = por %p96, %p97
      %s100 = sadd.s32 %s99, 1
      %p103 = scmp.eq.s32.totalorder %s27, 1
      %p104 = scmp.ne.s32.totalorder %s99, %s101
      %p105 = scmp.eq.s32.totalorder %s27, 0
      %p106 = por %p104, %p105
      %p107 = scmp.ne.s32.totalorder %s99, %s101
      %p108 = scmp.eq.s32.totalorder %s32, 1
      %p109 = por %p107, %p108
      %p110 = scmp.ne.s32.totalorder %s101, %s102
      %p111 = scmp.eq.s32.totalorder %s32, 0
      %p112 = por %p110, %p111
      %p113 = scmp.ne.s32.totalorder %s101, %s102
      %p114 = scmp.eq.s32.totalorder %s33, 1
      %p115 = por %p113, %p114
      %p117 = scmp.ne.s32.totalorder %s102, %s116
      %p118 = scmp.eq.s32.totalorder %s33, 0
      %p119 = por %p117, %p118
      %s121 = sadd.s32 %s120, 1
      %p124 = scmp.eq.s32.totalorder %s27, 1
      %p125 = scmp.ne.s32.totalorder %s120, %s122
      %p126 = scmp.eq.s32.totalorder %s27, 0
      %p127 = por %p125, %p126
      %p128 = scmp.ne.s32.totalorder %s120, %s122
      %p129 = scmp.eq.s32.totalorder %s32, 1
      %p130 = por %p128, %p129
      %p131 = scmp.ne.s32.totalorder %s122, %s123
      %p132 = scmp.eq.s32.totalorder %s32, 0
      %p133 = por %p131, %p132
      %p134 = scmp.ne.s32.totalorder %s122, %s123
      %p135 = scmp.eq.s32.totalorder %s33, 1
      %p136 = por %p134, %p135
      %p138 = scmp.ne.s32.totalorder %s123, %s137
      %p139 = scmp.eq.s32.totalorder %s33, 0
      %p140 = por %p138, %p139
      %s142 = sadd.s32 %s141, 1
      %p145 = scmp.eq.s32.totalorder %s27, 1
      %p146 = scmp.ne.s32.totalorder %s141, %s143
      %p147 = scmp.eq.s32.totalorder %s27, 0
      %p148 = por %p146, %p147
      %p149 = scmp.ne.s32.totalorder %s141, %s143
      %p150 = scmp.eq.s32.totalorder %s32, 1
      %p151 = por %p149, %p150
      %p152 = scmp.ne.s32.totalorder %s143, %s144
      %p153 = scmp.eq.s32.totalorder %s32, 0
      %p154 = por %p152, %p153
      %p155 = scmp.ne.s32.totalorder %s143, %s144
      %p156 = scmp.eq.s32.totalorder %s33, 1
      %p157 = por %p155, %p156
      %p159 = scmp.ne.s32.totalorder %s144, %s158
      %p160 = scmp.eq.s32.totalorder %s33, 0
      %p161 = por %p159, %p160
      %s163 = sadd.s32 %s162, 1
      %p166 = scmp.eq.s32.totalorder %s27, 1
      %p167 = scmp.ne.s32.totalorder %s162, %s164
      %p168 = scmp.eq.s32.totalorder %s27, 0
      %p169 = por %p167, %p168
      %p170 = scmp.ne.s32.totalorder %s162, %s164
      %p171 = scmp.eq.s32.totalorder %s32, 1
      %p172 = por %p170, %p171
      %p173 = scmp.ne.s32.totalorder %s164, %s165
      %p174 = scmp.eq.s32.totalorder %s32, 0
      %p175 = por %p173, %p174
      %p176 = scmp.ne.s32.totalorder %s164, %s165
      %p177 = scmp.eq.s32.totalorder %s33, 1
      %p178 = por %p176, %p177
      %p180 = scmp.ne.s32.totalorder %s165, %s179
      %p181 = scmp.eq.s32.totalorder %s33, 0
      %p182 = por %p180, %p181
      %s183 = ssub.s32 %s35, %s42
      %p184 = scmp.eq.s32.totalorder %s183, 0
      %s186 = sadd.s32 %s185, 1
      %s187 = scalar_select %p184, %s185, %s186
      %p190 = pneg %p184
      %p191 = scmp.eq.s32.totalorder %s27, 1
      %p192 = por %p190, %p191
      %p193 = scmp.ne.s32.totalorder %s185, %s188
      %p194 = scmp.eq.s32.totalorder %s27, 0
      %p195 = por %p193, %p194
      %p196 = scmp.ne.s32.totalorder %s185, %s188
      %p197 = scmp.eq.s32.totalorder %s32, 1
      %p198 = por %p196, %p197
      %p199 = scmp.ne.s32.totalorder %s188, %s189
      %p200 = scmp.eq.s32.totalorder %s32, 0
      %p201 = por %p199, %p200
      %p202 = scmp.ne.s32.totalorder %s188, %s189
      %p203 = scmp.eq.s32.totalorder %s33, 1
      %p204 = por %p202, %p203
      %p206 = scmp.ne.s32.totalorder %s189, %s205
      %p207 = scmp.eq.s32.totalorder %s33, 0
      %p208 = por %p206, %p207
      %s209 = ssub.s32 %s35, %s42
      %p210 = scmp.eq.s32.totalorder %s209, 0
      %s212 = sadd.s32 %s211, 1
      %s213 = scalar_select %p210, %s211, %s212
      %p216 = pneg %p210
      %p217 = scmp.eq.s32.totalorder %s27, 1
      %p218 = por %p216, %p217
      %p219 = scmp.ne.s32.totalorder %s211, %s214
      %p220 = scmp.eq.s32.totalorder %s27, 0
      %p221 = por %p219, %p220
      %p222 = scmp.ne.s32.totalorder %s211, %s214
      %p223 = scmp.eq.s32.totalorder %s32, 1
      %p224 = por %p222, %p223
      %p225 = scmp.ne.s32.totalorder %s214, %s215
      %p226 = scmp.eq.s32.totalorder %s32, 0
      %p227 = por %p225, %p226
      %p228 = scmp.ne.s32.totalorder %s214, %s215
      %p229 = scmp.eq.s32.totalorder %s33, 1
      %p230 = por %p228, %p229
      %p232 = scmp.ne.s32.totalorder %s215, %s231
      %p233 = scmp.eq.s32.totalorder %s33, 0
      %p234 = por %p232, %p233
      %s235 = ssub.s32 %s35, %s42
      %p236 = scmp.eq.s32.totalorder %s235, 0
      %s238 = sadd.s32 %s237, 1
      %s239 = scalar_select %p236, %s237, %s238
      %p242 = pneg %p236
      %p243 = scmp.eq.s32.totalorder %s27, 1
      %p244 = por %p242, %p243
      %p245 = scmp.ne.s32.totalorder %s237, %s240
      %p246 = scmp.eq.s32.totalorder %s27, 0
      %p247 = por %p245, %p246
      %p248 = scmp.ne.s32.totalorder %s237, %s240
      %p249 = scmp.eq.s32.totalorder %s32, 1
      %p250 = por %p248, %p249
      %p251 = scmp.ne.s32.totalorder %s240, %s241
      %p252 = scmp.eq.s32.totalorder %s32, 0
      %p253 = por %p251, %p252
      %p254 = scmp.ne.s32.totalorder %s240, %s241
      %p255 = scmp.eq.s32.totalorder %s33, 1
      %p256 = por %p254, %p255
      %p258 = scmp.ne.s32.totalorder %s241, %s257
      %p259 = scmp.eq.s32.totalorder %s33, 0
      %p260 = por %p258, %p259
      %s261 = ssub.s32 %s35, %s42
      %p262 = scmp.eq.s32.totalorder %s261, 0
      %s264 = sadd.s32 %s263, 1
      %s265 = scalar_select %p262, %s263, %s264
      %p268 = pneg %p262
      %p269 = scmp.eq.s32.totalorder %s27, 1
      %p270 = por %p268, %p269
      %p271 = scmp.ne.s32.totalorder %s263, %s266
      %p272 = scmp.eq.s32.totalorder %s27, 0
      %p273 = por %p271, %p272
      %p274 = scmp.ne.s32.totalorder %s263, %s266
      %p275 = scmp.eq.s32.totalorder %s32, 1
      %p276 = por %p274, %p275
      %p277 = scmp.ne.s32.totalorder %s266, %s267
      %p278 = scmp.eq.s32.totalorder %s32, 0
      %p279 = por %p277, %p278
      %p280 = scmp.ne.s32.totalorder %s266, %s267
      %p281 = scmp.eq.s32.totalorder %s33, 1
      %p282 = por %p280, %p281
      %p284 = scmp.ne.s32.totalorder %s267, %s283
      %p285 = scmp.eq.s32.totalorder %s33, 0
      %p286 = por %p284, %p285
      %s287 = ssub.s32 %s34, %s46
      %p288 = scmp.eq.s32.totalorder %s287, 0
      %s290 = sadd.s32 %s289, 1
      %s291 = scalar_select %p288, %s289, %s290
      %p294 = pneg %p288
      %p295 = scmp.eq.s32.totalorder %s27, 1
      %p296 = por %p294, %p295
      %p297 = scmp.ne.s32.totalorder %s289, %s292
      %p298 = scmp.eq.s32.totalorder %s27, 0
      %p299 = por %p297, %p298
      %p300 = scmp.ne.s32.totalorder %s289, %s292
      %p301 = scmp.eq.s32.totalorder %s32, 1
      %p302 = por %p300, %p301
      %p303 = scmp.ne.s32.totalorder %s292, %s293
      %p304 = scmp.eq.s32.totalorder %s32, 0
      %p305 = por %p303, %p304
      %p306 = scmp.ne.s32.totalorder %s292, %s293
      %p307 = scmp.eq.s32.totalorder %s33, 1
      %p308 = por %p306, %p307
      %p310 = scmp.ne.s32.totalorder %s293, %s309
      %p311 = scmp.eq.s32.totalorder %s33, 0
      %p312 = por %p310, %p311
      %p313 = scmp.le.s32.totalorder 1, %s27
      %p314 = scmp.lt.s32.totalorder %s27, 3
      %p315 = pnand %p313, %p314
      %p316 = pneg %p315
      // Predicated region
      $region9: #{tpu_custom_call.1} parent=5 // pred_check
        _
      $region10: #{tpu_custom_call.1} parent=5 // pred_check_branch
        %318 = sbr.rel (%p315) target = $region12
      $region11: #{tpu_custom_call.1} parent=5 // pred_region
        %s319 = ssub.s32 %s27, 1
        // Predicated region
        $region13: #{tpu_custom_call.1} parent=11 // pred_check
          %p320 = pneg %p112
        $region14: #{tpu_custom_call.1} parent=11 // pred_check_branch
          %322 = sbr.rel (%p320) target = $region16
        $region15: #{tpu_custom_call.1} parent=11 // pred_region
          _
        $region16: #{tpu_custom_call.1} parent=11 // pred_fallthru
          _
        // Predicated region
        $region17: #{tpu_custom_call.1} parent=11 // pred_check
          %p323 = pneg %p133
        $region18: #{tpu_custom_call.1} parent=11 // pred_check_branch
          %325 = sbr.rel (%p323) target = $region20
        $region19: #{tpu_custom_call.1} parent=11 // pred_region
          _
        $region20: #{tpu_custom_call.1} parent=11 // pred_fallthru
          _
        // Predicated region
        $region21: #{tpu_custom_call.1} parent=11 // pred_check
          %p326 = pneg %p154
        $region22: #{tpu_custom_call.1} parent=11 // pred_check_branch
          %328 = sbr.rel (%p326) target = $region24
        $region23: #{tpu_custom_call.1} parent=11 // pred_region
          _
        $region24: #{tpu_custom_call.1} parent=11 // pred_fallthru
          _
        // Predicated region
        $region25: #{tpu_custom_call.1} parent=11 // pred_check
          %p329 = pneg %p175
        $region26: #{tpu_custom_call.1} parent=11 // pred_check_branch
          %331 = sbr.rel (%p329) target = $region28
        $region27: #{tpu_custom_call.1} parent=11 // pred_region
          _
        $region28: #{tpu_custom_call.1} parent=11 // pred_fallthru
          _
        // Predicated region
        $region29: #{tpu_custom_call.1} parent=11 // pred_check
          %p332 = pneg %p201
        $region30: #{tpu_custom_call.1} parent=11 // pred_check_branch
          %334 = sbr.rel (%p332) target = $region32
        $region31: #{tpu_custom_call.1} parent=11 // pred_region
          %s336 = ssub.s32 512, 512
          %337 = vsyncadd [#allocation10], %s336
          %s338 = smul.addr %s37, 4
          %s339 = smul.addr %s338, 128
          %s340 = scalar_lea.hbm %s6, %s339
          %s341 = sshll.u32 [#allocation11], 4
          %s342 = int_to_ptr.vmem [resolvable:$true] %s341
          %347 = dma.hbm_to_vmem [thread:$0]  %s340, 512, %s342, [#allocation10], 128, 128, 8
        $region32: #{tpu_custom_call.1} parent=11 // pred_fallthru
          _
        // Predicated region
        $region33: #{tpu_custom_call.1} parent=11 // pred_check
          %p348 = pneg %p227
        $region34: #{tpu_custom_call.1} parent=11 // pred_check_branch
          %350 = sbr.rel (%p348) target = $region36
        $region35: #{tpu_custom_call.1} parent=11 // pred_region
          %s352 = ssub.s32 256, 256
          %353 = vsyncadd [#allocation13], %s352
          %s354 = smul.addr %s37, 2
          %s355 = smul.addr %s354, 128
          %s356 = scalar_lea.hbm %s7, %s355
          %s357 = sshll.u32 [#allocation12], 4
          %s358 = int_to_ptr.vmem [resolvable:$true] %s357
          %363 = dma.hbm_to_vmem [thread:$0]  %s356, 256, %s358, [#allocation13], 128, 128, 8
        $region36: #{tpu_custom_call.1} parent=11 // pred_fallthru
          _
        // Predicated region
        $region37: #{tpu_custom_call.1} parent=11 // pred_check
          %p364 = pneg %p253
        $region38: #{tpu_custom_call.1} parent=11 // pred_check_branch
          %366 = sbr.rel (%p364) target = $region40
        $region39: #{tpu_custom_call.1} parent=11 // pred_region
          %s368 = ssub.s32 256, 256
          %369 = vsyncadd [#allocation13], %s368
          %s370 = smul.addr %s37, 2
          %s371 = smul.addr %s370, 128
          %s372 = scalar_lea.hbm %s8, %s371
          %s373 = sshll.u32 [#allocation14], 4
          %s374 = int_to_ptr.vmem [resolvable:$true] %s373
          %379 = dma.hbm_to_vmem [thread:$0]  %s372, 256, %s374, [#allocation13], 128, 128, 8
        $region40: #{tpu_custom_call.1} parent=11 // pred_fallthru
          _
        // Predicated region
        $region41: #{tpu_custom_call.1} parent=11 // pred_check
          %p380 = pneg %p279
        $region42: #{tpu_custom_call.1} parent=11 // pred_check_branch
          %382 = sbr.rel (%p380) target = $region44
        $region43: #{tpu_custom_call.1} parent=11 // pred_region
          %s384 = ssub.s32 512, 512
          %385 = vsyncadd [#allocation16], %s384
          %s386 = smul.addr %s37, 4
          %s387 = smul.addr %s386, 128
          %s388 = scalar_lea.hbm %s9, %s387
          %s389 = sshll.u32 [#allocation15], 4
          %s390 = int_to_ptr.vmem [resolvable:$true] %s389
          %395 = dma.hbm_to_vmem [thread:$0]  %s388, 512, %s390, [#allocation16], 128, 128, 8
        $region44: #{tpu_custom_call.1} parent=11 // pred_fallthru
          _
      $region12: #{tpu_custom_call.1} parent=5 // pred_fallthru
        _
      %p396 = scmp.lt.s32.totalorder %s27, 2
      // Predicated region
      $region45: #{tpu_custom_call.1} parent=5 // pred_check
        %p397 = pneg %p396
      $region46: #{tpu_custom_call.1} parent=5 // pred_check_branch
        %399 = sbr.rel (%p397) target = $region48
      $region47: #{tpu_custom_call.1} parent=5 // pred_region
        // Predicated region
        $region49: #{tpu_custom_call.1} parent=47 // pred_check
          %p400 = pneg %p59
        $region50: #{tpu_custom_call.1} parent=47 // pred_check_branch
          %402 = sbr.rel (%p400) target = $region52
        $region51: #{tpu_custom_call.1} parent=47 // pred_region
          %s403 = sand.u32 %s49, 1
          %s404 = scalar_lea.sflag [#allocation7], %s403
          %s405 = sand.u32 %s49, 1
          %s406 = smul.addr %s405, 16
          %s407 = scalar_lea.vmem [#allocation6], %s406
          %s409 = ssub.s32 256, 256
          %410 = vsyncadd %s404, %s409
          %s411 = smul.addr %s34, 2
          %s412 = smul.addr %s411, 128
          %s413 = scalar_lea.hbm %s0, %s412
          %s414 = sshll.u32 %s407, 4
          %s415 = int_to_ptr.vmem [resolvable:$true] %s414
          %420 = dma.hbm_to_vmem [thread:$0]  %s413, 256, %s415, %s404, 128, 128, 8
        $region52: #{tpu_custom_call.1} parent=47 // pred_fallthru
          _
        // Predicated region
        $region53: #{tpu_custom_call.1} parent=47 // pred_check
          %p421 = pneg %p85
        $region54: #{tpu_custom_call.1} parent=47 // pred_check_branch
          %423 = sbr.rel (%p421) target = $region56
        $region55: #{tpu_custom_call.1} parent=47 // pred_region
          %s424 = sand.u32 %s27, 1
          %s425 = scalar_lea.sflag [#allocation10], %s424
          %s426 = sand.u32 %s75, 1
          %s427 = smul.addr %s426, 8
          %s428 = scalar_lea.vmem [#allocation9], %s427
          %s430 = ssub.s32 128, 128
          %431 = vsyncadd %s425, %s430
          %s432 = smul.addr %s34, 128
          %s433 = scalar_lea.hbm %s1, %s432
          %s435 = sshll.u32 %s428, 4
          %s436 = int_to_ptr.vmem [resolvable:$true] %s435
          %438 = dma.hbm_to_vmem [thread:$0]  %s433, 128, %s436, %s425
        $region56: #{tpu_custom_call.1} parent=47 // pred_fallthru
          _
      $region48: #{tpu_custom_call.1} parent=5 // pred_fallthru
        _
      %p439 = scmp.le.s32.totalorder 1, %s27
      %p440 = scmp.lt.s32.totalorder %s27, 3
      %p441 = pnand %p439, %p440
      %p442 = pneg %p441
      // Predicated region
      $region57: #{tpu_custom_call.1} parent=5 // pred_check
        _
      $region58: #{tpu_custom_call.1} parent=5 // pred_check_branch
        %444 = sbr.rel (%p441) target = $region60
      $region59: #{tpu_custom_call.1} parent=5 // pred_region
        %s445 = ssub.s32 %s27, 1
        %s446 = sand.u32 %s52, 1
        %s447 = scalar_lea.sflag [#allocation7], %s446
        %s448 = sand.u32 %s52, 1
        %s449 = smul.addr %s448, 16
        %s450 = scalar_lea.vmem [#allocation6], %s449
        // Predicated region
        $region61: #{tpu_custom_call.1} parent=59 // pred_check
          %p451 = pneg %p65
        $region62: #{tpu_custom_call.1} parent=59 // pred_check_branch
          %453 = sbr.rel (%p451) target = $region64
        $region63: #{tpu_custom_call.1} parent=59 // pred_region
          %454 = dma.done %s447, 256
        $region64: #{tpu_custom_call.1} parent=59 // pred_fallthru
          _
        %s455 = sand.u32 %s32, 1
        %s456 = scalar_lea.sflag [#allocation10], %s455
        %s457 = sand.u32 %s78, 1
        %s458 = smul.addr %s457, 8
        %s459 = scalar_lea.vmem [#allocation9], %s458
        // Predicated region
        $region65: #{tpu_custom_call.1} parent=59 // pred_check
          %p460 = pneg %p91
        $region66: #{tpu_custom_call.1} parent=59 // pred_check_branch
          %462 = sbr.rel (%p460) target = $region68
        $region67: #{tpu_custom_call.1} parent=59 // pred_region
          %463 = dma.done %s456, 128
        $region68: #{tpu_custom_call.1} parent=59 // pred_fallthru
          _
        // Predicated region
        $region69: #{tpu_custom_call.1} parent=59 // pred_check
          %p464 = pneg %p201
        $region70: #{tpu_custom_call.1} parent=59 // pred_check_branch
          %466 = sbr.rel (%p464) target = $region72
        $region71: #{tpu_custom_call.1} parent=59 // pred_region
          %467 = dma.done [#allocation10], 512
        $region72: #{tpu_custom_call.1} parent=59 // pred_fallthru
          _
        // Predicated region
        $region73: #{tpu_custom_call.1} parent=59 // pred_check
          %p468 = pneg %p227
        $region74: #{tpu_custom_call.1} parent=59 // pred_check_branch
          %470 = sbr.rel (%p468) target = $region76
        $region75: #{tpu_custom_call.1} parent=59 // pred_region
          %471 = dma.done [#allocation13], 256
        $region76: #{tpu_custom_call.1} parent=59 // pred_fallthru
          _
        // Predicated region
        $region77: #{tpu_custom_call.1} parent=59 // pred_check
          %p472 = pneg %p253
        $region78: #{tpu_custom_call.1} parent=59 // pred_check_branch
          %474 = sbr.rel (%p472) target = $region80
        $region79: #{tpu_custom_call.1} parent=59 // pred_region
          %475 = dma.done [#allocation13], 256
        $region80: #{tpu_custom_call.1} parent=59 // pred_fallthru
          _
        // Predicated region
        $region81: #{tpu_custom_call.1} parent=59 // pred_check
          %p476 = pneg %p279
        $region82: #{tpu_custom_call.1} parent=59 // pred_check_branch
          %478 = sbr.rel (%p476) target = $region84
        $region83: #{tpu_custom_call.1} parent=59 // pred_region
          %479 = dma.done [#allocation16], 512
        $region84: #{tpu_custom_call.1} parent=59 // pred_fallthru
          _
        %s480 = sand.u32 %s52, 1
        %s481 = scalar_lea.sflag [#allocation7], %s480
        %s482 = sand.u32 %s52, 1
        %s483 = smul.addr %s482, 16
        %s484 = scalar_lea.vmem [#allocation6], %s483
        %p485 = pneg %p65
        %p486 = pneg %p62
        %s487 = sand.u32 %s32, 1
        %s488 = scalar_lea.sflag [#allocation10], %s487
        %s489 = sand.u32 %s78, 1
        %s490 = smul.addr %s489, 8
        %s491 = scalar_lea.vmem [#allocation9], %s490
        %p492 = pneg %p91
        %p493 = pneg %p88
        %p494 = pneg %p112
        %p495 = pneg %p109
        %p496 = pneg %p133
        %p497 = pneg %p130
        %p498 = pneg %p154
        %p499 = pneg %p151
        %p500 = pneg %p175
        %p501 = pneg %p172
        %p502 = pneg %p201
        %p503 = pneg %p198
        %p504 = pneg %p227
        %p505 = pneg %p224
        %p506 = pneg %p253
        %p507 = pneg %p250
        %p508 = pneg %p279
        %p509 = pneg %p276
        %p510 = pneg %p305
        %p511 = pneg %p302
        %s512 = sand.u32 %s292, 1
        %s513 = scalar_lea.sflag [#allocation8], %s512
        %s514 = sand.u32 %s292, 1
        %s515 = smul.addr %s514, 8
        %s516 = scalar_lea.vmem [#allocation17], %s515
        %p517 = scmp.eq.s32.totalorder %s37, 0
        // Predicated region
        $region85: #{tpu_custom_call.1} parent=59 // pred_check
          %p518 = pneg %p517
        $region86: #{tpu_custom_call.1} parent=59 // pred_check_branch
          %520 = sbr.rel (%p518) target = $region88
        $region87: #{tpu_custom_call.1} parent=59 // pred_region
          %v521 = vld [vmem:[%s450] sm:$0xff]
          %v522 = vld [vmem:[%s450 + $0x8] sm:$0xff]
          %v523 = vld [vmem:[%s2] sm:$0x1]
          %v524 = vld [vmem:[%s3] sm:$0x1]
          %vm525 = vcmask 130048
          %v526 = vsel %vm525, %v521, 0.0
          %527 = vadd.xlane.f32.xlu0 %v526
          %v528 = vpop.xlane.xlu0 %527
          %v529 = vsel %vm525, %v522, 0.0
          %530 = vadd.xlane.f32.xlu0 %v529
          %v531 = vpop.xlane.xlu0 %530
          %v532 = vrcp.pop 16.0
          %v533 = vmul.f32 %v528, %v532
          %v534 = vmul.f32 %v531, %v532
          %v535 = vsub.f32 %v521, %v533
          %v536 = vsub.f32 %v522, %v534
          %v537 = vmul.f32 %v535, %v535
          %v538 = vmul.f32 %v536, %v536
          %v539 = vsel %vm525, %v537, 0.0
          %540 = vadd.xlane.f32.xlu0 %v539
          %v541 = vpop.xlane.xlu0 %540
          %v542 = vsel %vm525, %v538, 0.0
          %543 = vadd.xlane.f32.xlu0 %v542
          %v544 = vpop.xlane.xlu0 %543
          %v545 = vmul.f32 %v541, %v532
          %v546 = vmul.f32 %v544, %v532
          %v547 = vadd.f32 %v545, 1e-05
          %v548 = vadd.f32 %v546, 1e-05
          %v549 = vrsqrt.pop %v547
          %v550 = vrsqrt.pop %v548
          %v551 = vmul.f32 %v535, %v549
          %v552 = vmul.f32 %v536, %v550
          %v554 = vlaneseq
          %v555 = vshrl.u32 %v554, 7
          %v556 = vsub.s32 0, %v555
          %v557 = vrot.slane %v523, %v556
          %v559 = vmul.f32 %v551, %v557
          %v560 = vmul.f32 %v552, %v557
          %v562 = vlaneseq
          %v563 = vshrl.u32 %v562, 7
          %v564 = vsub.s32 0, %v563
          %v565 = vrot.slane %v524, %v564
          %v567 = vadd.f32 %v559, %v565
          %v568 = vadd.f32 %v560, %v565
          %569 = vst.msk [vmem:[#allocation2] sm:$0xff] %vm525, %v567
          %570 = vst.msk [vmem:[#allocation2 + $0x8] sm:$0xff] %vm525, %v568
          %v571 = vld [vmem:[%s459] sm:$0xff]
          %v572 = vld [vmem:[%s4] sm:$0x1]
          %v573 = vld [vmem:[%s5] sm:$0x1]
          %vm574 = vcmask 261120
          %v575 = vsel %vm574, %v571, 0.0
          %576 = vadd.xlane.f32.xlu0 %v575
          %v577 = vpop.xlane.xlu0 %576
          %v578 = vrcp.pop 32.0
          %v579 = vmul.f32 %v577, %v578
          %v580 = vsub.f32 %v571, %v579
          %v581 = vmul.f32 %v580, %v580
          %v582 = vsel %vm574, %v581, 0.0
          %583 = vadd.xlane.f32.xlu0 %v582
          %v584 = vpop.xlane.xlu0 %583
          %v585 = vmul.f32 %v584, %v578
          %v586 = vadd.f32 %v585, 1e-05
          %v587 = vrsqrt.pop %v586
          %v588 = vmul.f32 %v580, %v587
          %v590 = vlaneseq
          %v591 = vshrl.u32 %v590, 7
          %v592 = vsub.s32 0, %v591
          %v593 = vrot.slane %v572, %v592
          %v595 = vmul.f32 %v588, %v593
          %v597 = vlaneseq
          %v598 = vshrl.u32 %v597, 7
          %v599 = vsub.s32 0, %v598
          %v600 = vrot.slane %v573, %v599
          %v602 = vadd.f32 %v595, %v600
          %v603 = vmul.f32 %v602, 0.35355338
          %604 = vst.msk [vmem:[#allocation3] sm:$0xff] %vm574, %v603
          %605 = vst.msk [vmem:[#allocation5] sm:$0xff] %vm574, 0.0
        $region88: #{tpu_custom_call.1} parent=59 // pred_fallthru
          _
        %v606 = vld [vmem:[#allocation2] sm:$0xff]
        %v607 = vld [vmem:[#allocation2 + $0x8] sm:$0xff]
        %v608 = vld [vmem:[#allocation3] sm:$0xff]
        %v609 = vld [vmem:[#allocation11] sm:$0xff]
        %v610 = vld [vmem:[#allocation11 + $0x8] sm:$0xff]
        %v611 = vld [vmem:[#allocation11 + $0x10] sm:$0xff]
        %v612 = vld [vmem:[#allocation11 + $0x18] sm:$0xff]
        %vm613 = vcmask 261120
        %v615 = vsel %vm613, %v608, 0
        %617 = vmatprep.subr.mxu0 0.0
        %618 = vmatpush1.msra.mxu0 0.0
        %619 = vmatprep.subr.mxu0 0.0
        %620 = vmatpush1.msra.mxu0 0.0
        %621 = vmatprep.subr.mxu0 0.0
        %622 = vmatpush1.msra.mxu0 0.0
        %623 = vmatprep.subr.mxu0 0.0
        %624 = vmatpush1.msra.mxu0 0.0
        %625 = vmatprep.subr.mxu0 0.0
        %626 = vmatpush1.msra.mxu0 0.0
        %627 = vmatprep.subr.mxu0 0.0
        %628 = vmatpush1.msra.mxu0 0.0
        %629 = vmatprep.subr.mxu0 0.0
        %630 = vmatpush1.msra.mxu0 0.0
        %631 = vmatprep.subr.mxu0 0.0
        %632 = vmatpush1.msra.mxu0 0.0
        %633 = vmatprep.subr.mxu0 0.0
        %634 = vmatpush1.msra.mxu0 0.0
        %635 = vmatprep.subr.mxu0 0.0
        %636 = vmatpush1.msra.mxu0 0.0
        %637 = vmatprep.subr.mxu0 0.0
        %638 = vmatpush1.msra.mxu0 0.0
        %639 = vmatprep.subr.mxu0 0.0
        %640 = vmatpush1.msra.mxu0 0.0
        %641 = vmatprep.subr.mxu0 0.0
        %642 = vmatpush1.msra.mxu0 %v612
        %643 = vmatprep.subr.mxu0 0.0
        %644 = vmatpush1.msra.mxu0 %v611
        %645 = vmatprep.subr.mxu0 0.0
        %646 = vmatpush1.msra.mxu0 %v610
        %647 = vmatprep.subr.mxu0 0.0
        %648 = vmatpush1.msra.mxu0 %v609
        %649 = vmatprep.subr.mxu0 0.0
        %650 = vmatpush2.msra.mxu0 0.0
        %651 = vmatprep.subr.mxu0 0.0
        %652 = vmatpush2.msra.mxu0 0.0
        %653 = vmatprep.subr.mxu0 0.0
        %654 = vmatpush2.msra.mxu0 0.0
        %655 = vmatprep.subr.mxu0 0.0
        %656 = vmatpush2.msra.mxu0 0.0
        %657 = vmatprep.subr.mxu0 0.0
        %658 = vmatpush2.msra.mxu0 0.0
        %659 = vmatprep.subr.mxu0 0.0
        %660 = vmatpush2.msra.mxu0 0.0
        %661 = vmatprep.subr.mxu0 0.0
        %662 = vmatpush2.msra.mxu0 0.0
        %663 = vmatprep.subr.mxu0 0.0
        %664 = vmatpush2.msra.mxu0 0.0
        %665 = vmatprep.subr.mxu0 0.0
        %666 = vmatpush2.msra.mxu0 0.0
        %667 = vmatprep.subr.mxu0 0.0
        %668 = vmatpush2.msra.mxu0 0.0
        %669 = vmatprep.subr.mxu0 0.0
        %670 = vmatpush2.msra.mxu0 0.0
        %671 = vmatprep.subr.mxu0 0.0
        %672 = vmatpush2.msra.mxu0 0.0
        %673 = vmatprep.subr.mxu0 0.0
        %674 = vmatpush2.msra.mxu0 0.0
        %675 = vmatprep.subr.mxu0 0.0
        %676 = vmatpush2.msra.mxu0 0.0
        %677 = vmatprep.subr.mxu0 0.0
        %678 = vmatpush2.msra.mxu0 0.0
        %679 = vmatprep.subr.mxu0 0.0
        %680 = vmatpush2.msra.mxu0 0.0
        %681 = vmatprep.mubr.f32.mxu0 0.0
        %682 = vmatmul.mubr.f32.gmra.mxu0 %v615
        %v683 = vpop.f32.mrf.mxu0
        %v684 = vadd.f32 0.0, %v683
        %v685 = vpop.f32.mrf.mxu0
        %686 = vdwg.mxu0
        %v687 = vld [vmem:[#allocation12] sm:$0xff]
        %v688 = vld [vmem:[#allocation12 + $0x8] sm:$0xff]
        %vm689 = vcmask 130048
        %v691 = vsel %vm689, %v606, 0
        %v694 = vsel %vm689, %v607, 0
        %696 = vmatprep.subr.mxu0 0.0
        %697 = vmatpush1.msra.mxu0 0.0
        %698 = vmatprep.subr.mxu0 0.0
        %699 = vmatpush1.msra.mxu0 0.0
        %700 = vmatprep.subr.mxu0 0.0
        %701 = vmatpush1.msra.mxu0 0.0
        %702 = vmatprep.subr.mxu0 0.0
        %703 = vmatpush1.msra.mxu0 0.0
        %704 = vmatprep.subr.mxu0 0.0
        %705 = vmatpush1.msra.mxu0 0.0
        %706 = vmatprep.subr.mxu0 0.0
        %707 = vmatpush1.msra.mxu0 0.0
        %708 = vmatprep.subr.mxu0 0.0
        %709 = vmatpush1.msra.mxu0 0.0
        %710 = vmatprep.subr.mxu0 0.0
        %711 = vmatpush1.msra.mxu0 0.0
        %712 = vmatprep.subr.mxu0 0.0
        %713 = vmatpush1.msra.mxu0 0.0
        %714 = vmatprep.subr.mxu0 0.0
        %715 = vmatpush1.msra.mxu0 0.0
        %716 = vmatprep.subr.mxu0 0.0
        %717 = vmatpush1.msra.mxu0 0.0
        %718 = vmatprep.subr.mxu0 0.0
        %719 = vmatpush1.msra.mxu0 0.0
        %720 = vmatprep.subr.mxu0 0.0
        %721 = vmatpush1.msra.mxu0 0.0
        %722 = vmatprep.subr.mxu0 0.0
        %723 = vmatpush1.msra.mxu0 0.0
        %724 = vmatprep.subr.mxu0 0.0
        %725 = vmatpush1.msra.mxu0 %v688
        %726 = vmatprep.subr.mxu0 0.0
        %727 = vmatpush1.msra.mxu0 %v687
        %728 = vmatprep.subr.mxu0 0.0
        %729 = vmatpush2.msra.mxu0 0.0
        %730 = vmatprep.subr.mxu0 0.0
        %731 = vmatpush2.msra.mxu0 0.0
        %732 = vmatprep.subr.mxu0 0.0
        %733 = vmatpush2.msra.mxu0 0.0
        %734 = vmatprep.subr.mxu0 0.0
        %735 = vmatpush2.msra.mxu0 0.0
        %736 = vmatprep.subr.mxu0 0.0
        %737 = vmatpush2.msra.mxu0 0.0
        %738 = vmatprep.subr.mxu0 0.0
        %739 = vmatpush2.msra.mxu0 0.0
        %740 = vmatprep.subr.mxu0 0.0
        %741 = vmatpush2.msra.mxu0 0.0
        %742 = vmatprep.subr.mxu0 0.0
        %743 = vmatpush2.msra.mxu0 0.0
        %744 = vmatprep.subr.mxu0 0.0
        %745 = vmatpush2.msra.mxu0 0.0
        %746 = vmatprep.subr.mxu0 0.0
        %747 = vmatpush2.msra.mxu0 0.0
        %748 = vmatprep.subr.mxu0 0.0
        %749 = vmatpush2.msra.mxu0 0.0
        %750 = vmatprep.subr.mxu0 0.0
        %751 = vmatpush2.msra.mxu0 0.0
        %752 = vmatprep.subr.mxu0 0.0
        %753 = vmatpush2.msra.mxu0 0.0
        %754 = vmatprep.subr.mxu0 0.0
        %755 = vmatpush2.msra.mxu0 0.0
        %756 = vmatprep.subr.mxu0 0.0
        %757 = vmatpush2.msra.mxu0 0.0
        %758 = vmatprep.subr.mxu0 0.0
        %759 = vmatpush2.msra.mxu0 0.0
        %760 = vmatprep.mubr.f32.mxu0 0.0
        %761 = vmatmul.mubr.f32.gmra.mxu0 %v691
        %v762 = vpop.f32.mrf.mxu0
        %v763 = vadd.f32 0.0, %v762
        %v764 = vpop.f32.mrf.mxu0
        %765 = vmatprep.mubr.f32.mxu0 0.0
        %766 = vmatmul.mubr.f32.gmra.mxu0 %v694
        %v767 = vpop.f32.mrf.mxu0
        %v768 = vadd.f32 0.0, %v767
        %v769 = vpop.f32.mrf.mxu0
        %770 = vdwg.mxu0
        %v771 = vld [vmem:[#allocation14] sm:$0xff]
        %v772 = vld [vmem:[#allocation14 + $0x8] sm:$0xff]
        %773 = vmatprep.subr.mxu0 0.0
        %774 = vmatpush1.msra.mxu0 0.0
        %775 = vmatprep.subr.mxu0 0.0
        %776 = vmatpush1.msra.mxu0 0.0
        %777 = vmatprep.subr.mxu0 0.0
        %778 = vmatpush1.msra.mxu0 0.0
        %779 = vmatprep.subr.mxu0 0.0
        %780 = vmatpush1.msra.mxu0 0.0
        %781 = vmatprep.subr.mxu0 0.0
        %782 = vmatpush1.msra.mxu0 0.0
        %783 = vmatprep.subr.mxu0 0.0
        %784 = vmatpush1.msra.mxu0 0.0
        %785 = vmatprep.subr.mxu0 0.0
        %786 = vmatpush1.msra.mxu0 0.0
        %787 = vmatprep.subr.mxu0 0.0
        %788 = vmatpush1.msra.mxu0 0.0
        %789 = vmatprep.subr.mxu0 0.0
        %790 = vmatpush1.msra.mxu0 0.0
        %791 = vmatprep.subr.mxu0 0.0
        %792 = vmatpush1.msra.mxu0 0.0
        %793 = vmatprep.subr.mxu0 0.0
        %794 = vmatpush1.msra.mxu0 0.0
        %795 = vmatprep.subr.mxu0 0.0
        %796 = vmatpush1.msra.mxu0 0.0
        %797 = vmatprep.subr.mxu0 0.0
        %798 = vmatpush1.msra.mxu0 0.0
        %799 = vmatprep.subr.mxu0 0.0
        %800 = vmatpush1.msra.mxu0 0.0
        %801 = vmatprep.subr.mxu0 0.0
        %802 = vmatpush1.msra.mxu0 %v772
        %803 = vmatprep.subr.mxu0 0.0
        %804 = vmatpush1.msra.mxu0 %v771
        %805 = vmatprep.subr.mxu0 0.0
        %806 = vmatpush2.msra.mxu0 0.0
        %807 = vmatprep.subr.mxu0 0.0
        %808 = vmatpush2.msra.mxu0 0.0
        %809 = vmatprep.subr.mxu0 0.0
        %810 = vmatpush2.msra.mxu0 0.0
        %811 = vmatprep.subr.mxu0 0.0
        %812 = vmatpush2.msra.mxu0 0.0
        %813 = vmatprep.subr.mxu0 0.0
        %814 = vmatpush2.msra.mxu0 0.0
        %815 = vmatprep.subr.mxu0 0.0
        %816 = vmatpush2.msra.mxu0 0.0
        %817 = vmatprep.subr.mxu0 0.0
        %818 = vmatpush2.msra.mxu0 0.0
        %819 = vmatprep.subr.mxu0 0.0
        %820 = vmatpush2.msra.mxu0 0.0
        %821 = vmatprep.subr.mxu0 0.0
        %822 = vmatpush2.msra.mxu0 0.0
        %823 = vmatprep.subr.mxu0 0.0
        %824 = vmatpush2.msra.mxu0 0.0
        %825 = vmatprep.subr.mxu0 0.0
        %826 = vmatpush2.msra.mxu0 0.0
        %827 = vmatprep.subr.mxu0 0.0
        %828 = vmatpush2.msra.mxu0 0.0
        %829 = vmatprep.subr.mxu0 0.0
        %830 = vmatpush2.msra.mxu0 0.0
        %831 = vmatprep.subr.mxu0 0.0
        %832 = vmatpush2.msra.mxu0 0.0
        %833 = vmatprep.subr.mxu0 0.0
        %834 = vmatpush2.msra.mxu0 0.0
        %835 = vmatprep.subr.mxu0 0.0
        %836 = vmatpush2.msra.mxu0 0.0
        %837 = vmatprep.mubr.f32.mxu0 0.0
        %838 = vmatmul.mubr.f32.gmra.mxu0 %v691
        %v839 = vpop.f32.mrf.mxu0
        %v840 = vadd.f32 0.0, %v839
        %v841 = vpop.f32.mrf.mxu0
        %842 = vmatprep.mubr.f32.mxu0 0.0
        %843 = vmatmul.mubr.f32.gmra.mxu0 %v694
        %v844 = vpop.f32.mrf.mxu0
        %v845 = vadd.f32 0.0, %v844
        %v846 = vpop.f32.mrf.mxu0
        %847 = vdwg.mxu0
        %vm848 = vcmask 64512
        %v850 = vsel %vm848, %v684, 0
        %v853 = vsel %vm848, %v763, 0
        %v856 = vsel %vm848, %v768, 0
        %858 = vmatprep.subr.mxu0 0.0
        %859 = vmatpush1.xpose.msra.mxu0 0.0
        %860 = vmatprep.subr.mxu0 0.0
        %861 = vmatpush1.xpose.msra.mxu0 0.0
        %862 = vmatprep.subr.mxu0 0.0
        %863 = vmatpush1.xpose.msra.mxu0 0.0
        %864 = vmatprep.subr.mxu0 0.0
        %865 = vmatpush1.xpose.msra.mxu0 0.0
        %866 = vmatprep.subr.mxu0 0.0
        %867 = vmatpush1.xpose.msra.mxu0 0.0
        %868 = vmatprep.subr.mxu0 0.0
        %869 = vmatpush1.xpose.msra.mxu0 0.0
        %870 = vmatprep.subr.mxu0 0.0
        %871 = vmatpush1.xpose.msra.mxu0 0.0
        %872 = vmatprep.subr.mxu0 0.0
        %873 = vmatpush1.xpose.msra.mxu0 0.0
        %874 = vmatprep.subr.mxu0 0.0
        %875 = vmatpush1.xpose.msra.mxu0 0.0
        %876 = vmatprep.subr.mxu0 0.0
        %877 = vmatpush1.xpose.msra.mxu0 0.0
        %878 = vmatprep.subr.mxu0 0.0
        %879 = vmatpush1.xpose.msra.mxu0 0.0
        %880 = vmatprep.subr.mxu0 0.0
        %881 = vmatpush1.xpose.msra.mxu0 0.0
        %882 = vmatprep.subr.mxu0 0.0
        %883 = vmatpush1.xpose.msra.mxu0 0.0
        %884 = vmatprep.subr.mxu0 0.0
        %885 = vmatpush1.xpose.msra.mxu0 0.0
        %886 = vmatprep.subr.mxu0 0.0
        %887 = vmatpush1.xpose.msra.mxu0 %v856
        %888 = vmatprep.subr.mxu0 0.0
        %889 = vmatpush1.xpose.msra.mxu0 %v853
        %890 = vmatprep.subr.mxu0 0.0
        %891 = vmatpush2.xpose.msra.mxu0 0.0
        %892 = vmatprep.subr.mxu0 0.0
        %893 = vmatpush2.xpose.msra.mxu0 0.0
        %894 = vmatprep.subr.mxu0 0.0
        %895 = vmatpush2.xpose.msra.mxu0 0.0
        %896 = vmatprep.subr.mxu0 0.0
        %897 = vmatpush2.xpose.msra.mxu0 0.0
        %898 = vmatprep.subr.mxu0 0.0
        %899 = vmatpush2.xpose.msra.mxu0 0.0
        %900 = vmatprep.subr.mxu0 0.0
        %901 = vmatpush2.xpose.msra.mxu0 0.0
        %902 = vmatprep.subr.mxu0 0.0
        %903 = vmatpush2.xpose.msra.mxu0 0.0
        %904 = vmatprep.subr.mxu0 0.0
        %905 = vmatpush2.xpose.msra.mxu0 0.0
        %906 = vmatprep.subr.mxu0 0.0
        %907 = vmatpush2.xpose.msra.mxu0 0.0
        %908 = vmatprep.subr.mxu0 0.0
        %909 = vmatpush2.xpose.msra.mxu0 0.0
        %910 = vmatprep.subr.mxu0 0.0
        %911 = vmatpush2.xpose.msra.mxu0 0.0
        %912 = vmatprep.subr.mxu0 0.0
        %913 = vmatpush2.xpose.msra.mxu0 0.0
        %914 = vmatprep.subr.mxu0 0.0
        %915 = vmatpush2.xpose.msra.mxu0 0.0
        %916 = vmatprep.subr.mxu0 0.0
        %917 = vmatpush2.xpose.msra.mxu0 0.0
        %918 = vmatprep.subr.mxu0 0.0
        %919 = vmatpush2.xpose.msra.mxu0 0.0
        %920 = vmatprep.subr.mxu0 0.0
        %921 = vmatpush2.xpose.msra.mxu0 0.0
        %922 = vmatprep.mubr.f32.mxu0 0.0
        %923 = vmatmul.mubr.f32.gmra.mxu0 %v850
        %v924 = vpop.f32.mrf.mxu0
        %v925 = vadd.f32 0.0, %v924
        %v926 = vpop.f32.mrf.mxu0
        %927 = vdwg.mxu0
        %v928 = vsel %vm689, %v925, -inf
        %929 = vmax.xlane.f32.xlu0 %v928
        %v930 = vpop.xlane.xlu0 %929
        %v931 = vsub.f32 %v925, %v930
        %v932 = vmul.f32 %v931, 1.442695
        %v933 = vpow.pop %v932
        %v934 = vsel %vm689, %v933, 0.0
        %935 = vadd.xlane.f32.xlu0 %v934
        %v936 = vpop.xlane.xlu0 %935
        %v938 = vsel %vm689, %v933, 0
        %940 = vmatprep.subr.mxu0 0.0
        %941 = vmatpush1.msra.mxu0 0.0
        %942 = vmatprep.subr.mxu0 0.0
        %943 = vmatpush1.msra.mxu0 0.0
        %944 = vmatprep.subr.mxu0 0.0
        %945 = vmatpush1.msra.mxu0 0.0
        %946 = vmatprep.subr.mxu0 0.0
        %947 = vmatpush1.msra.mxu0 0.0
        %948 = vmatprep.subr.mxu0 0.0
        %949 = vmatpush1.msra.mxu0 0.0
        %950 = vmatprep.subr.mxu0 0.0
        %951 = vmatpush1.msra.mxu0 0.0
        %952 = vmatprep.subr.mxu0 0.0
        %953 = vmatpush1.msra.mxu0 0.0
        %954 = vmatprep.subr.mxu0 0.0
        %955 = vmatpush1.msra.mxu0 0.0
        %956 = vmatprep.subr.mxu0 0.0
        %957 = vmatpush1.msra.mxu0 0.0
        %958 = vmatprep.subr.mxu0 0.0
        %959 = vmatpush1.msra.mxu0 0.0
        %960 = vmatprep.subr.mxu0 0.0
        %961 = vmatpush1.msra.mxu0 0.0
        %962 = vmatprep.subr.mxu0 0.0
        %963 = vmatpush1.msra.mxu0 0.0
        %964 = vmatprep.subr.mxu0 0.0
        %965 = vmatpush1.msra.mxu0 0.0
        %966 = vmatprep.subr.mxu0 0.0
        %967 = vmatpush1.msra.mxu0 0.0
        %968 = vmatprep.subr.mxu0 0.0
        %969 = vmatpush1.msra.mxu0 %v845
        %970 = vmatprep.subr.mxu0 0.0
        %971 = vmatpush1.msra.mxu0 %v840
        %972 = vmatprep.subr.mxu0 0.0
        %973 = vmatpush2.msra.mxu0 0.0
        %974 = vmatprep.subr.mxu0 0.0
        %975 = vmatpush2.msra.mxu0 0.0
        %976 = vmatprep.subr.mxu0 0.0
        %977 = vmatpush2.msra.mxu0 0.0
        %978 = vmatprep.subr.mxu0 0.0
        %979 = vmatpush2.msra.mxu0 0.0
        %980 = vmatprep.subr.mxu0 0.0
        %981 = vmatpush2.msra.mxu0 0.0
        %982 = vmatprep.subr.mxu0 0.0
        %983 = vmatpush2.msra.mxu0 0.0
        %984 = vmatprep.subr.mxu0 0.0
        %985 = vmatpush2.msra.mxu0 0.0
        %986 = vmatprep.subr.mxu0 0.0
        %987 = vmatpush2.msra.mxu0 0.0
        %988 = vmatprep.subr.mxu0 0.0
        %989 = vmatpush2.msra.mxu0 0.0
        %990 = vmatprep.subr.mxu0 0.0
        %991 = vmatpush2.msra.mxu0 0.0
        %992 = vmatprep.subr.mxu0 0.0
        %993 = vmatpush2.msra.mxu0 0.0
        %994 = vmatprep.subr.mxu0 0.0
        %995 = vmatpush2.msra.mxu0 0.0
        %996 = vmatprep.subr.mxu0 0.0
        %997 = vmatpush2.msra.mxu0 0.0
        %998 = vmatprep.subr.mxu0 0.0
        %999 = vmatpush2.msra.mxu0 0.0
        %1000 = vmatprep.subr.mxu0 0.0
        %1001 = vmatpush2.msra.mxu0 0.0
        %1002 = vmatprep.subr.mxu0 0.0
        %1003 = vmatpush2.msra.mxu0 0.0
        %1004 = vmatprep.mubr.f32.mxu0 0.0
        %1005 = vmatmul.mubr.f32.gmra.mxu0 %v938
        %v1006 = vpop.f32.mrf.mxu0
        %v1007 = vadd.f32 0.0, %v1006
        %v1008 = vpop.f32.mrf.mxu0
        %1009 = vdwg.mxu0
        %v1010 = vrcp.pop %v936
        %v1011 = vmul.f32 %v1007, %v1010
        %1012 = vst.msk [vmem:[#allocation4] sm:$0xff] %vm848, %v1011
        %1013 = vrot.lane.b32.xlu0 %v684, 120
        %v1014 = vpop.permute.xlu0 %1013
        %1015 = vrot.lane.b32.xlu0 %v763, 120
        %v1016 = vpop.permute.xlu0 %1015
        %1017 = vrot.lane.b32.xlu0 %v768, 120
        %v1018 = vpop.permute.xlu0 %1017
        %v1019 = vsel %vm848, %v1014, 0
        %v1021 = vsel %vm848, %v1016, 0
        %v1023 = vsel %vm848, %v1018, 0
        %1025 = vmatprep.subr.mxu0 0.0
        %1026 = vmatpush1.xpose.msra.mxu0 0.0
        %1027 = vmatprep.subr.mxu0 0.0
        %1028 = vmatpush1.xpose.msra.mxu0 0.0
        %1029 = vmatprep.subr.mxu0 0.0
        %1030 = vmatpush1.xpose.msra.mxu0 0.0
        %1031 = vmatprep.subr.mxu0 0.0
        %1032 = vmatpush1.xpose.msra.mxu0 0.0
        %1033 = vmatprep.subr.mxu0 0.0
        %1034 = vmatpush1.xpose.msra.mxu0 0.0
        %1035 = vmatprep.subr.mxu0 0.0
        %1036 = vmatpush1.xpose.msra.mxu0 0.0
        %1037 = vmatprep.subr.mxu0 0.0
        %1038 = vmatpush1.xpose.msra.mxu0 0.0
        %1039 = vmatprep.subr.mxu0 0.0
        %1040 = vmatpush1.xpose.msra.mxu0 0.0
        %1041 = vmatprep.subr.mxu0 0.0
        %1042 = vmatpush1.xpose.msra.mxu0 0.0
        %1043 = vmatprep.subr.mxu0 0.0
        %1044 = vmatpush1.xpose.msra.mxu0 0.0
        %1045 = vmatprep.subr.mxu0 0.0
        %1046 = vmatpush1.xpose.msra.mxu0 0.0
        %1047 = vmatprep.subr.mxu0 0.0
        %1048 = vmatpush1.xpose.msra.mxu0 0.0
        %1049 = vmatprep.subr.mxu0 0.0
        %1050 = vmatpush1.xpose.msra.mxu0 0.0
        %1051 = vmatprep.subr.mxu0 0.0
        %1052 = vmatpush1.xpose.msra.mxu0 0.0
        %1053 = vmatprep.subr.mxu0 0.0
        %1054 = vmatpush1.xpose.msra.mxu0 %v1023
        %1055 = vmatprep.subr.mxu0 0.0
        %1056 = vmatpush1.xpose.msra.mxu0 %v1021
        %1057 = vmatprep.subr.mxu0 0.0
        %1058 = vmatpush2.xpose.msra.mxu0 0.0
        %1059 = vmatprep.subr.mxu0 0.0
        %1060 = vmatpush2.xpose.msra.mxu0 0.0
        %1061 = vmatprep.subr.mxu0 0.0
        %1062 = vmatpush2.xpose.msra.mxu0 0.0
        %1063 = vmatprep.subr.mxu0 0.0
        %1064 = vmatpush2.xpose.msra.mxu0 0.0
        %1065 = vmatprep.subr.mxu0 0.0
        %1066 = vmatpush2.xpose.msra.mxu0 0.0
        %1067 = vmatprep.subr.mxu0 0.0
        %1068 = vmatpush2.xpose.msra.mxu0 0.0
        %1069 = vmatprep.subr.mxu0 0.0
        %1070 = vmatpush2.xpose.msra.mxu0 0.0
        %1071 = vmatprep.subr.mxu0 0.0
        %1072 = vmatpush2.xpose.msra.mxu0 0.0
        %1073 = vmatprep.subr.mxu0 0.0
        %1074 = vmatpush2.xpose.msra.mxu0 0.0
        %1075 = vmatprep.subr.mxu0 0.0
        %1076 = vmatpush2.xpose.msra.mxu0 0.0
        %1077 = vmatprep.subr.mxu0 0.0
        %1078 = vmatpush2.xpose.msra.mxu0 0.0
        %1079 = vmatprep.subr.mxu0 0.0
        %1080 = vmatpush2.xpose.msra.mxu0 0.0
        %1081 = vmatprep.subr.mxu0 0.0
        %1082 = vmatpush2.xpose.msra.mxu0 0.0
        %1083 = vmatprep.subr.mxu0 0.0
        %1084 = vmatpush2.xpose.msra.mxu0 0.0
        %1085 = vmatprep.subr.mxu0 0.0
        %1086 = vmatpush2.xpose.msra.mxu0 0.0
        %1087 = vmatprep.subr.mxu0 0.0
        %1088 = vmatpush2.xpose.msra.mxu0 0.0
        %1089 = vmatprep.mubr.f32.mxu0 0.0
        %1090 = vmatmul.mubr.f32.gmra.mxu0 %v1019
        %v1091 = vpop.f32.mrf.mxu0
        %v1092 = vadd.f32 0.0, %v1091
        %v1093 = vpop.f32.mrf.mxu0
        %1094 = vdwg.mxu0
        %v1095 = vsel %vm689, %v1092, -inf
        %1096 = vmax.xlane.f32.xlu0 %v1095
        %v1097 = vpop.xlane.xlu0 %1096
        %v1098 = vsub.f32 %v1092, %v1097
        %v1099 = vmul.f32 %v1098, 1.442695
        %v1100 = vpow.pop %v1099
        %v1101 = vsel %vm689, %v1100, 0.0
        %1102 = vadd.xlane.f32.xlu0 %v1101
        %v1103 = vpop.xlane.xlu0 %1102
        %1106 = vrot.lane.b32.xlu0 %v840, 120
        %v1107 = vpop.permute.xlu0 %1106
        %1108 = vrot.lane.b32.xlu0 %v845, 120
        %v1109 = vpop.permute.xlu0 %1108
        %v1113 = vsel %vm689, %v1100, 0
        %1115 = vmatprep.subr.mxu0 0.0
        %1116 = vmatpush1.msra.mxu0 0.0
        %1117 = vmatprep.subr.mxu0 0.0
        %1118 = vmatpush1.msra.mxu0 0.0
        %1119 = vmatprep.subr.mxu0 0.0
        %1120 = vmatpush1.msra.mxu0 0.0
        %1121 = vmatprep.subr.mxu0 0.0
        %1122 = vmatpush1.msra.mxu0 0.0
        %1123 = vmatprep.subr.mxu0 0.0
        %1124 = vmatpush1.msra.mxu0 0.0
        %1125 = vmatprep.subr.mxu0 0.0
        %1126 = vmatpush1.msra.mxu0 0.0
        %1127 = vmatprep.subr.mxu0 0.0
        %1128 = vmatpush1.msra.mxu0 0.0
        %1129 = vmatprep.subr.mxu0 0.0
        %1130 = vmatpush1.msra.mxu0 0.0
        %1131 = vmatprep.subr.mxu0 0.0
        %1132 = vmatpush1.msra.mxu0 0.0
        %1133 = vmatprep.subr.mxu0 0.0
        %1134 = vmatpush1.msra.mxu0 0.0
        %1135 = vmatprep.subr.mxu0 0.0
        %1136 = vmatpush1.msra.mxu0 0.0
        %1137 = vmatprep.subr.mxu0 0.0
        %1138 = vmatpush1.msra.mxu0 0.0
        %1139 = vmatprep.subr.mxu0 0.0
        %1140 = vmatpush1.msra.mxu0 0.0
        %1141 = vmatprep.subr.mxu0 0.0
        %1142 = vmatpush1.msra.mxu0 0.0
        %1143 = vmatprep.subr.mxu0 0.0
        %1144 = vmatpush1.msra.mxu0 %v1109
        %1145 = vmatprep.subr.mxu0 0.0
        %1146 = vmatpush1.msra.mxu0 %v1107
        %1147 = vmatprep.subr.mxu0 0.0
        %1148 = vmatpush2.msra.mxu0 0.0
        %1149 = vmatprep.subr.mxu0 0.0
        %1150 = vmatpush2.msra.mxu0 0.0
        %1151 = vmatprep.subr.mxu0 0.0
        %1152 = vmatpush2.msra.mxu0 0.0
        %1153 = vmatprep.subr.mxu0 0.0
        %1154 = vmatpush2.msra.mxu0 0.0
        %1155 = vmatprep.subr.mxu0 0.0
        %1156 = vmatpush2.msra.mxu0 0.0
        %1157 = vmatprep.subr.mxu0 0.0
        %1158 = vmatpush2.msra.mxu0 0.0
        %1159 = vmatprep.subr.mxu0 0.0
        %1160 = vmatpush2.msra.mxu0 0.0
        %1161 = vmatprep.subr.mxu0 0.0
        %1162 = vmatpush2.msra.mxu0 0.0
        %1163 = vmatprep.subr.mxu0 0.0
        %1164 = vmatpush2.msra.mxu0 0.0
        %1165 = vmatprep.subr.mxu0 0.0
        %1166 = vmatpush2.msra.mxu0 0.0
        %1167 = vmatprep.subr.mxu0 0.0
        %1168 = vmatpush2.msra.mxu0 0.0
        %1169 = vmatprep.subr.mxu0 0.0
        %1170 = vmatpush2.msra.mxu0 0.0
        %1171 = vmatprep.subr.mxu0 0.0
        %1172 = vmatpush2.msra.mxu0 0.0
        %1173 = vmatprep.subr.mxu0 0.0
        %1174 = vmatpush2.msra.mxu0 0.0
        %1175 = vmatprep.subr.mxu0 0.0
        %1176 = vmatpush2.msra.mxu0 0.0
        %1177 = vmatprep.subr.mxu0 0.0
        %1178 = vmatpush2.msra.mxu0 0.0
        %1179 = vmatprep.mubr.f32.mxu0 0.0
        %1180 = vmatmul.mubr.f32.gmra.mxu0 %v1113
        %v1181 = vpop.f32.mrf.mxu0
        %v1182 = vadd.f32 0.0, %v1181
        %v1183 = vpop.f32.mrf.mxu0
        %1184 = vdwg.mxu0
        %v1185 = vrcp.pop %v1103
        %v1186 = vmul.f32 %v1182, %v1185
        %1188 = vrot.lane.b32.xlu0 %v1186, 8
        %v1189 = vpop.permute.xlu0 %1188
        %vm1191 = vcmask 130112
        %1192 = vst.msk [vmem:[#allocation4] sm:$0xff] %vm1191, %v1189
        %1193 = vrot.lane.b32.xlu0 %v684, 112
        %v1194 = vpop.permute.xlu0 %1193
        %1195 = vrot.lane.b32.xlu0 %v763, 112
        %v1196 = vpop.permute.xlu0 %1195
        %1197 = vrot.lane.b32.xlu0 %v768, 112
        %v1198 = vpop.permute.xlu0 %1197
        %v1199 = vsel %vm848, %v1194, 0
        %v1201 = vsel %vm848, %v1196, 0
        %v1203 = vsel %vm848, %v1198, 0
        %1205 = vmatprep.subr.mxu0 0.0
        %1206 = vmatpush1.xpose.msra.mxu0 0.0
        %1207 = vmatprep.subr.mxu0 0.0
        %1208 = vmatpush1.xpose.msra.mxu0 0.0
        %1209 = vmatprep.subr.mxu0 0.0
        %1210 = vmatpush1.xpose.msra.mxu0 0.0
        %1211 = vmatprep.subr.mxu0 0.0
        %1212 = vmatpush1.xpose.msra.mxu0 0.0
        %1213 = vmatprep.subr.mxu0 0.0
        %1214 = vmatpush1.xpose.msra.mxu0 0.0
        %1215 = vmatprep.subr.mxu0 0.0
        %1216 = vmatpush1.xpose.msra.mxu0 0.0
        %1217 = vmatprep.subr.mxu0 0.0
        %1218 = vmatpush1.xpose.msra.mxu0 0.0
        %1219 = vmatprep.subr.mxu0 0.0
        %1220 = vmatpush1.xpose.msra.mxu0 0.0
        %1221 = vmatprep.subr.mxu0 0.0
        %1222 = vmatpush1.xpose.msra.mxu0 0.0
        %1223 = vmatprep.subr.mxu0 0.0
        %1224 = vmatpush1.xpose.msra.mxu0 0.0
        %1225 = vmatprep.subr.mxu0 0.0
        %1226 = vmatpush1.xpose.msra.mxu0 0.0
        %1227 = vmatprep.subr.mxu0 0.0
        %1228 = vmatpush1.xpose.msra.mxu0 0.0
        %1229 = vmatprep.subr.mxu0 0.0
        %1230 = vmatpush1.xpose.msra.mxu0 0.0
        %1231 = vmatprep.subr.mxu0 0.0
        %1232 = vmatpush1.xpose.msra.mxu0 0.0
        %1233 = vmatprep.subr.mxu0 0.0
        %1234 = vmatpush1.xpose.msra.mxu0 %v1203
        %1235 = vmatprep.subr.mxu0 0.0
        %1236 = vmatpush1.xpose.msra.mxu0 %v1201
        %1237 = vmatprep.subr.mxu0 0.0
        %1238 = vmatpush2.xpose.msra.mxu0 0.0
        %1239 = vmatprep.subr.mxu0 0.0
        %1240 = vmatpush2.xpose.msra.mxu0 0.0
        %1241 = vmatprep.subr.mxu0 0.0
        %1242 = vmatpush2.xpose.msra.mxu0 0.0
        %1243 = vmatprep.subr.mxu0 0.0
        %1244 = vmatpush2.xpose.msra.mxu0 0.0
        %1245 = vmatprep.subr.mxu0 0.0
        %1246 = vmatpush2.xpose.msra.mxu0 0.0
        %1247 = vmatprep.subr.mxu0 0.0
        %1248 = vmatpush2.xpose.msra.mxu0 0.0
        %1249 = vmatprep.subr.mxu0 0.0
        %1250 = vmatpush2.xpose.msra.mxu0 0.0
        %1251 = vmatprep.subr.mxu0 0.0
        %1252 = vmatpush2.xpose.msra.mxu0 0.0
        %1253 = vmatprep.subr.mxu0 0.0
        %1254 = vmatpush2.xpose.msra.mxu0 0.0
        %1255 = vmatprep.subr.mxu0 0.0
        %1256 = vmatpush2.xpose.msra.mxu0 0.0
        %1257 = vmatprep.subr.mxu0 0.0
        %1258 = vmatpush2.xpose.msra.mxu0 0.0
        %1259 = vmatprep.subr.mxu0 0.0
        %1260 = vmatpush2.xpose.msra.mxu0 0.0
        %1261 = vmatprep.subr.mxu0 0.0
        %1262 = vmatpush2.xpose.msra.mxu0 0.0
        %1263 = vmatprep.subr.mxu0 0.0
        %1264 = vmatpush2.xpose.msra.mxu0 0.0
        %1265 = vmatprep.subr.mxu0 0.0
        %1266 = vmatpush2.xpose.msra.mxu0 0.0
        %1267 = vmatprep.subr.mxu0 0.0
        %1268 = vmatpush2.xpose.msra.mxu0 0.0
        %1269 = vmatprep.mubr.f32.mxu0 0.0
        %1270 = vmatmul.mubr.f32.gmra.mxu0 %v1199
        %v1271 = vpop.f32.mrf.mxu0
        %v1272 = vadd.f32 0.0, %v1271
        %v1273 = vpop.f32.mrf.mxu0
        %1274 = vdwg.mxu0
        %v1275 = vsel %vm689, %v1272, -inf
        %1276 = vmax.xlane.f32.xlu0 %v1275
        %v1277 = vpop.xlane.xlu0 %1276
        %v1278 = vsub.f32 %v1272, %v1277
        %v1279 = vmul.f32 %v1278, 1.442695
        %v1280 = vpow.pop %v1279
        %v1281 = vsel %vm689, %v1280, 0.0
        %1282 = vadd.xlane.f32.xlu0 %v1281
        %v1283 = vpop.xlane.xlu0 %1282
        %1284 = vrot.lane.b32.xlu0 %v840, 112
        %v1285 = vpop.permute.xlu0 %1284
        %1286 = vrot.lane.b32.xlu0 %v845, 112
        %v1287 = vpop.permute.xlu0 %1286
        %v1291 = vsel %vm689, %v1280, 0
        %1293 = vmatprep.subr.mxu0 0.0
        %1294 = vmatpush1.msra.mxu0 0.0
        %1295 = vmatprep.subr.mxu0 0.0
        %1296 = vmatpush1.msra.mxu0 0.0
        %1297 = vmatprep.subr.mxu0 0.0
        %1298 = vmatpush1.msra.mxu0 0.0
        %1299 = vmatprep.subr.mxu0 0.0
        %1300 = vmatpush1.msra.mxu0 0.0
        %1301 = vmatprep.subr.mxu0 0.0
        %1302 = vmatpush1.msra.mxu0 0.0
        %1303 = vmatprep.subr.mxu0 0.0
        %1304 = vmatpush1.msra.mxu0 0.0
        %1305 = vmatprep.subr.mxu0 0.0
        %1306 = vmatpush1.msra.mxu0 0.0
        %1307 = vmatprep.subr.mxu0 0.0
        %1308 = vmatpush1.msra.mxu0 0.0
        %1309 = vmatprep.subr.mxu0 0.0
        %1310 = vmatpush1.msra.mxu0 0.0
        %1311 = vmatprep.subr.mxu0 0.0
        %1312 = vmatpush1.msra.mxu0 0.0
        %1313 = vmatprep.subr.mxu0 0.0
        %1314 = vmatpush1.msra.mxu0 0.0
        %1315 = vmatprep.subr.mxu0 0.0
        %1316 = vmatpush1.msra.mxu0 0.0
        %1317 = vmatprep.subr.mxu0 0.0
        %1318 = vmatpush1.msra.mxu0 0.0
        %1319 = vmatprep.subr.mxu0 0.0
        %1320 = vmatpush1.msra.mxu0 0.0
        %1321 = vmatprep.subr.mxu0 0.0
        %1322 = vmatpush1.msra.mxu0 %v1287
        %1323 = vmatprep.subr.mxu0 0.0
        %1324 = vmatpush1.msra.mxu0 %v1285
        %1325 = vmatprep.subr.mxu0 0.0
        %1326 = vmatpush2.msra.mxu0 0.0
        %1327 = vmatprep.subr.mxu0 0.0
        %1328 = vmatpush2.msra.mxu0 0.0
        %1329 = vmatprep.subr.mxu0 0.0
        %1330 = vmatpush2.msra.mxu0 0.0
        %1331 = vmatprep.subr.mxu0 0.0
        %1332 = vmatpush2.msra.mxu0 0.0
        %1333 = vmatprep.subr.mxu0 0.0
        %1334 = vmatpush2.msra.mxu0 0.0
        %1335 = vmatprep.subr.mxu0 0.0
        %1336 = vmatpush2.msra.mxu0 0.0
        %1337 = vmatprep.subr.mxu0 0.0
        %1338 = vmatpush2.msra.mxu0 0.0
        %1339 = vmatprep.subr.mxu0 0.0
        %1340 = vmatpush2.msra.mxu0 0.0
        %1341 = vmatprep.subr.mxu0 0.0
        %1342 = vmatpush2.msra.mxu0 0.0
        %1343 = vmatprep.subr.mxu0 0.0
        %1344 = vmatpush2.msra.mxu0 0.0
        %1345 = vmatprep.subr.mxu0 0.0
        %1346 = vmatpush2.msra.mxu0 0.0
        %1347 = vmatprep.subr.mxu0 0.0
        %1348 = vmatpush2.msra.mxu0 0.0
        %1349 = vmatprep.subr.mxu0 0.0
        %1350 = vmatpush2.msra.mxu0 0.0
        %1351 = vmatprep.subr.mxu0 0.0
        %1352 = vmatpush2.msra.mxu0 0.0
        %1353 = vmatprep.subr.mxu0 0.0
        %1354 = vmatpush2.msra.mxu0 0.0
        %1355 = vmatprep.subr.mxu0 0.0
        %1356 = vmatpush2.msra.mxu0 0.0
        %1357 = vmatprep.mubr.f32.mxu0 0.0
        %1358 = vmatmul.mubr.f32.gmra.mxu0 %v1291
        %v1359 = vpop.f32.mrf.mxu0
        %v1360 = vadd.f32 0.0, %v1359
        %v1361 = vpop.f32.mrf.mxu0
        %1362 = vdwg.mxu0
        %v1363 = vrcp.pop %v1283
        %v1364 = vmul.f32 %v1360, %v1363
        %1366 = vrot.lane.b32.xlu0 %v1364, 16
        %v1367 = vpop.permute.xlu0 %1366
        %vm1369 = vcmask 195712
        %1370 = vst.msk [vmem:[#allocation4] sm:$0xff] %vm1369, %v1367
        %1371 = vrot.lane.b32.xlu0 %v684, 104
        %v1372 = vpop.permute.xlu0 %1371
        %1373 = vrot.lane.b32.xlu0 %v763, 104
        %v1374 = vpop.permute.xlu0 %1373
        %1375 = vrot.lane.b32.xlu0 %v768, 104
        %v1376 = vpop.permute.xlu0 %1375
        %v1377 = vsel %vm848, %v1372, 0
        %v1379 = vsel %vm848, %v1374, 0
        %v1381 = vsel %vm848, %v1376, 0
        %1383 = vmatprep.subr.mxu0 0.0
        %1384 = vmatpush1.xpose.msra.mxu0 0.0
        %1385 = vmatprep.subr.mxu0 0.0
        %1386 = vmatpush1.xpose.msra.mxu0 0.0
        %1387 = vmatprep.subr.mxu0 0.0
        %1388 = vmatpush1.xpose.msra.mxu0 0.0
        %1389 = vmatprep.subr.mxu0 0.0
        %1390 = vmatpush1.xpose.msra.mxu0 0.0
        %1391 = vmatprep.subr.mxu0 0.0
        %1392 = vmatpush1.xpose.msra.mxu0 0.0
        %1393 = vmatprep.subr.mxu0 0.0
        %1394 = vmatpush1.xpose.msra.mxu0 0.0
        %1395 = vmatprep.subr.mxu0 0.0
        %1396 = vmatpush1.xpose.msra.mxu0 0.0
        %1397 = vmatprep.subr.mxu0 0.0
        %1398 = vmatpush1.xpose.msra.mxu0 0.0
        %1399 = vmatprep.subr.mxu0 0.0
        %1400 = vmatpush1.xpose.msra.mxu0 0.0
        %1401 = vmatprep.subr.mxu0 0.0
        %1402 = vmatpush1.xpose.msra.mxu0 0.0
        %1403 = vmatprep.subr.mxu0 0.0
        %1404 = vmatpush1.xpose.msra.mxu0 0.0
        %1405 = vmatprep.subr.mxu0 0.0
        %1406 = vmatpush1.xpose.msra.mxu0 0.0
        %1407 = vmatprep.subr.mxu0 0.0
        %1408 = vmatpush1.xpose.msra.mxu0 0.0
        %1409 = vmatprep.subr.mxu0 0.0
        %1410 = vmatpush1.xpose.msra.mxu0 0.0
        %1411 = vmatprep.subr.mxu0 0.0
        %1412 = vmatpush1.xpose.msra.mxu0 %v1381
        %1413 = vmatprep.subr.mxu0 0.0
        %1414 = vmatpush1.xpose.msra.mxu0 %v1379
        %1415 = vmatprep.subr.mxu0 0.0
        %1416 = vmatpush2.xpose.msra.mxu0 0.0
        %1417 = vmatprep.subr.mxu0 0.0
        %1418 = vmatpush2.xpose.msra.mxu0 0.0
        %1419 = vmatprep.subr.mxu0 0.0
        %1420 = vmatpush2.xpose.msra.mxu0 0.0
        %1421 = vmatprep.subr.mxu0 0.0
        %1422 = vmatpush2.xpose.msra.mxu0 0.0
        %1423 = vmatprep.subr.mxu0 0.0
        %1424 = vmatpush2.xpose.msra.mxu0 0.0
        %1425 = vmatprep.subr.mxu0 0.0
        %1426 = vmatpush2.xpose.msra.mxu0 0.0
        %1427 = vmatprep.subr.mxu0 0.0
        %1428 = vmatpush2.xpose.msra.mxu0 0.0
        %1429 = vmatprep.subr.mxu0 0.0
        %1430 = vmatpush2.xpose.msra.mxu0 0.0
        %1431 = vmatprep.subr.mxu0 0.0
        %1432 = vmatpush2.xpose.msra.mxu0 0.0
        %1433 = vmatprep.subr.mxu0 0.0
        %1434 = vmatpush2.xpose.msra.mxu0 0.0
        %1435 = vmatprep.subr.mxu0 0.0
        %1436 = vmatpush2.xpose.msra.mxu0 0.0
        %1437 = vmatprep.subr.mxu0 0.0
        %1438 = vmatpush2.xpose.msra.mxu0 0.0
        %1439 = vmatprep.subr.mxu0 0.0
        %1440 = vmatpush2.xpose.msra.mxu0 0.0
        %1441 = vmatprep.subr.mxu0 0.0
        %1442 = vmatpush2.xpose.msra.mxu0 0.0
        %1443 = vmatprep.subr.mxu0 0.0
        %1444 = vmatpush2.xpose.msra.mxu0 0.0
        %1445 = vmatprep.subr.mxu0 0.0
        %1446 = vmatpush2.xpose.msra.mxu0 0.0
        %1447 = vmatprep.mubr.f32.mxu0 0.0
        %1448 = vmatmul.mubr.f32.gmra.mxu0 %v1377
        %v1449 = vpop.f32.mrf.mxu0
        %v1450 = vadd.f32 0.0, %v1449
        %v1451 = vpop.f32.mrf.mxu0
        %1452 = vdwg.mxu0
        %v1453 = vsel %vm689, %v1450, -inf
        %1454 = vmax.xlane.f32.xlu0 %v1453
        %v1455 = vpop.xlane.xlu0 %1454
        %v1456 = vsub.f32 %v1450, %v1455
        %v1457 = vmul.f32 %v1456, 1.442695
        %v1458 = vpow.pop %v1457
        %v1459 = vsel %vm689, %v1458, 0.0
        %1460 = vadd.xlane.f32.xlu0 %v1459
        %v1461 = vpop.xlane.xlu0 %1460
        %1462 = vrot.lane.b32.xlu0 %v840, 104
        %v1463 = vpop.permute.xlu0 %1462
        %1464 = vrot.lane.b32.xlu0 %v845, 104
        %v1465 = vpop.permute.xlu0 %1464
        %v1469 = vsel %vm689, %v1458, 0
        %1471 = vmatprep.subr.mxu0 0.0
        %1472 = vmatpush1.msra.mxu0 0.0
        %1473 = vmatprep.subr.mxu0 0.0
        %1474 = vmatpush1.msra.mxu0 0.0
        %1475 = vmatprep.subr.mxu0 0.0
        %1476 = vmatpush1.msra.mxu0 0.0
        %1477 = vmatprep.subr.mxu0 0.0
        %1478 = vmatpush1.msra.mxu0 0.0
        %1479 = vmatprep.subr.mxu0 0.0
        %1480 = vmatpush1.msra.mxu0 0.0
        %1481 = vmatprep.subr.mxu0 0.0
        %1482 = vmatpush1.msra.mxu0 0.0
        %1483 = vmatprep.subr.mxu0 0.0
        %1484 = vmatpush1.msra.mxu0 0.0
        %1485 = vmatprep.subr.mxu0 0.0
        %1486 = vmatpush1.msra.mxu0 0.0
        %1487 = vmatprep.subr.mxu0 0.0
        %1488 = vmatpush1.msra.mxu0 0.0
        %1489 = vmatprep.subr.mxu0 0.0
        %1490 = vmatpush1.msra.mxu0 0.0
        %1491 = vmatprep.subr.mxu0 0.0
        %1492 = vmatpush1.msra.mxu0 0.0
        %1493 = vmatprep.subr.mxu0 0.0
        %1494 = vmatpush1.msra.mxu0 0.0
        %1495 = vmatprep.subr.mxu0 0.0
        %1496 = vmatpush1.msra.mxu0 0.0
        %1497 = vmatprep.subr.mxu0 0.0
        %1498 = vmatpush1.msra.mxu0 0.0
        %1499 = vmatprep.subr.mxu0 0.0
        %1500 = vmatpush1.msra.mxu0 %v1465
        %1501 = vmatprep.subr.mxu0 0.0
        %1502 = vmatpush1.msra.mxu0 %v1463
        %1503 = vmatprep.subr.mxu0 0.0
        %1504 = vmatpush2.msra.mxu0 0.0
        %1505 = vmatprep.subr.mxu0 0.0
        %1506 = vmatpush2.msra.mxu0 0.0
        %1507 = vmatprep.subr.mxu0 0.0
        %1508 = vmatpush2.msra.mxu0 0.0
        %1509 = vmatprep.subr.mxu0 0.0
        %1510 = vmatpush2.msra.mxu0 0.0
        %1511 = vmatprep.subr.mxu0 0.0
        %1512 = vmatpush2.msra.mxu0 0.0
        %1513 = vmatprep.subr.mxu0 0.0
        %1514 = vmatpush2.msra.mxu0 0.0
        %1515 = vmatprep.subr.mxu0 0.0
        %1516 = vmatpush2.msra.mxu0 0.0
        %1517 = vmatprep.subr.mxu0 0.0
        %1518 = vmatpush2.msra.mxu0 0.0
        %1519 = vmatprep.subr.mxu0 0.0
        %1520 = vmatpush2.msra.mxu0 0.0
        %1521 = vmatprep.subr.mxu0 0.0
        %1522 = vmatpush2.msra.mxu0 0.0
        %1523 = vmatprep.subr.mxu0 0.0
        %1524 = vmatpush2.msra.mxu0 0.0
        %1525 = vmatprep.subr.mxu0 0.0
        %1526 = vmatpush2.msra.mxu0 0.0
        %1527 = vmatprep.subr.mxu0 0.0
        %1528 = vmatpush2.msra.mxu0 0.0
        %1529 = vmatprep.subr.mxu0 0.0
        %1530 = vmatpush2.msra.mxu0 0.0
        %1531 = vmatprep.subr.mxu0 0.0
        %1532 = vmatpush2.msra.mxu0 0.0
        %1533 = vmatprep.subr.mxu0 0.0
        %1534 = vmatpush2.msra.mxu0 0.0
        %1535 = vmatprep.mubr.f32.mxu0 0.0
        %1536 = vmatmul.mubr.f32.gmra.mxu0 %v1469
        %v1537 = vpop.f32.mrf.mxu0
        %v1538 = vadd.f32 0.0, %v1537
        %v1539 = vpop.f32.mrf.mxu0
        %1540 = vdwg.mxu0
        %v1541 = vrcp.pop %v1461
        %v1542 = vmul.f32 %v1538, %v1541
        %1544 = vrot.lane.b32.xlu0 %v1542, 24
        %v1545 = vpop.permute.xlu0 %1544
        %vm1547 = vcmask 261312
        %1548 = vst.msk [vmem:[#allocation4] sm:$0xff] %vm1547, %v1545
        %v1549 = vld [vmem:[#allocation5] sm:$0xff]
        %v1550 = vld [vmem:[#allocation4] sm:$0xff]
        %v1551 = vld [vmem:[#allocation15] sm:$0xff]
        %v1552 = vld [vmem:[#allocation15 + $0x8] sm:$0xff]
        %v1553 = vld [vmem:[#allocation15 + $0x10] sm:$0xff]
        %v1554 = vld [vmem:[#allocation15 + $0x18] sm:$0xff]
        %v1556 = vsel %vm613, %v1550, 0
        %1558 = vmatprep.subr.mxu0 0.0
        %1559 = vmatpush1.msra.mxu0 0.0
        %1560 = vmatprep.subr.mxu0 0.0
        %1561 = vmatpush1.msra.mxu0 0.0
        %1562 = vmatprep.subr.mxu0 0.0
        %1563 = vmatpush1.msra.mxu0 0.0
        %1564 = vmatprep.subr.mxu0 0.0
        %1565 = vmatpush1.msra.mxu0 0.0
        %1566 = vmatprep.subr.mxu0 0.0
        %1567 = vmatpush1.msra.mxu0 0.0
        %1568 = vmatprep.subr.mxu0 0.0
        %1569 = vmatpush1.msra.mxu0 0.0
        %1570 = vmatprep.subr.mxu0 0.0
        %1571 = vmatpush1.msra.mxu0 0.0
        %1572 = vmatprep.subr.mxu0 0.0
        %1573 = vmatpush1.msra.mxu0 0.0
        %1574 = vmatprep.subr.mxu0 0.0
        %1575 = vmatpush1.msra.mxu0 0.0
        %1576 = vmatprep.subr.mxu0 0.0
        %1577 = vmatpush1.msra.mxu0 0.0
        %1578 = vmatprep.subr.mxu0 0.0
        %1579 = vmatpush1.msra.mxu0 0.0
        %1580 = vmatprep.subr.mxu0 0.0
        %1581 = vmatpush1.msra.mxu0 0.0
        %1582 = vmatprep.subr.mxu0 0.0
        %1583 = vmatpush1.msra.mxu0 %v1554
        %1584 = vmatprep.subr.mxu0 0.0
        %1585 = vmatpush1.msra.mxu0 %v1553
        %1586 = vmatprep.subr.mxu0 0.0
        %1587 = vmatpush1.msra.mxu0 %v1552
        %1588 = vmatprep.subr.mxu0 0.0
        %1589 = vmatpush1.msra.mxu0 %v1551
        %1590 = vmatprep.subr.mxu0 0.0
        %1591 = vmatpush2.msra.mxu0 0.0
        %1592 = vmatprep.subr.mxu0 0.0
        %1593 = vmatpush2.msra.mxu0 0.0
        %1594 = vmatprep.subr.mxu0 0.0
        %1595 = vmatpush2.msra.mxu0 0.0
        %1596 = vmatprep.subr.mxu0 0.0
        %1597 = vmatpush2.msra.mxu0 0.0
        %1598 = vmatprep.subr.mxu0 0.0
        %1599 = vmatpush2.msra.mxu0 0.0
        %1600 = vmatprep.subr.mxu0 0.0
        %1601 = vmatpush2.msra.mxu0 0.0
        %1602 = vmatprep.subr.mxu0 0.0
        %1603 = vmatpush2.msra.mxu0 0.0
        %1604 = vmatprep.subr.mxu0 0.0
        %1605 = vmatpush2.msra.mxu0 0.0
        %1606 = vmatprep.subr.mxu0 0.0
        %1607 = vmatpush2.msra.mxu0 0.0
        %1608 = vmatprep.subr.mxu0 0.0
        %1609 = vmatpush2.msra.mxu0 0.0
        %1610 = vmatprep.subr.mxu0 0.0
        %1611 = vmatpush2.msra.mxu0 0.0
        %1612 = vmatprep.subr.mxu0 0.0
        %1613 = vmatpush2.msra.mxu0 0.0
        %1614 = vmatprep.subr.mxu0 0.0
        %1615 = vmatpush2.msra.mxu0 0.0
        %1616 = vmatprep.subr.mxu0 0.0
        %1617 = vmatpush2.msra.mxu0 0.0
        %1618 = vmatprep.subr.mxu0 0.0
        %1619 = vmatpush2.msra.mxu0 0.0
        %1620 = vmatprep.subr.mxu0 0.0
        %1621 = vmatpush2.msra.mxu0 0.0
        %1622 = vmatprep.mubr.f32.mxu0 0.0
        %1623 = vmatmul.mubr.f32.gmra.mxu0 %v1556
        %v1624 = vpop.f32.mrf.mxu0
        %v1625 = vadd.f32 0.0, %v1624
        %v1626 = vpop.f32.mrf.mxu0
        %1627 = vdwg.mxu0
        %v1628 = vadd.f32 %v1549, %v1625
        %1629 = vst.msk [vmem:[#allocation5] sm:$0xff] %vm613, %v1628
        // Predicated region
        $region89: #{tpu_custom_call.1} parent=59 // pred_check
          %p1630 = pneg %p517
        $region90: #{tpu_custom_call.1} parent=59 // pred_check_branch
          %1632 = sbr.rel (%p1630) target = $region92
        $region91: #{tpu_custom_call.1} parent=59 // pred_region
          %v1633 = vld [vmem:[#allocation5] sm:$0xff]
          %1634 = vst.msk [vmem:[%s516] sm:$0xff] %vm613, %v1633
        $region92: #{tpu_custom_call.1} parent=59 // pred_fallthru
          _
        %s1635 = sand.u32 %s292, 1
        %s1636 = scalar_lea.sflag [#allocation8], %s1635
        %s1637 = sand.u32 %s292, 1
        %s1638 = smul.addr %s1637, 8
        %s1639 = scalar_lea.vmem [#allocation17], %s1638
        // Predicated region
        $region93: #{tpu_custom_call.1} parent=59 // pred_check
          %p1640 = pneg %p302
        $region94: #{tpu_custom_call.1} parent=59 // pred_check_branch
          %1642 = sbr.rel (%p1640) target = $region96
        $region95: #{tpu_custom_call.1} parent=59 // pred_region
          %s1644 = ssub.s32 128, 128
          %1645 = vsyncadd %s1636, %s1644
          %s1646 = smul.addr %s36, 128
          %s1647 = scalar_lea.hbm %s10, %s1646
          %s1649 = sshll.u32 %s1639, 4
          %s1650 = int_to_ptr.vmem [resolvable:$true] %s1649
          %1652 = dma.vmem_to_hbm [thread:$0]  %s1650, 128, %s1647, %s1636
        $region96: #{tpu_custom_call.1} parent=59 // pred_fallthru
          _
      $region60: #{tpu_custom_call.1} parent=5 // pred_fallthru
        _
      %p1653 = scmp.le.s32.totalorder 2, %s27
      // Predicated region
      $region97: #{tpu_custom_call.1} parent=5 // pred_check
        %p1654 = pneg %p1653
      $region98: #{tpu_custom_call.1} parent=5 // pred_check_branch
        %1656 = sbr.rel (%p1654) target = $region100
      $region99: #{tpu_custom_call.1} parent=5 // pred_region
        %s1657 = ssub.s32 %s27, 2
        // Predicated region
        $region101: #{tpu_custom_call.1} parent=99 // pred_check
          %p1658 = pneg %p308
        $region102: #{tpu_custom_call.1} parent=99 // pred_check_branch
          %1660 = sbr.rel (%p1658) target = $region104
        $region103: #{tpu_custom_call.1} parent=99 // pred_region
          %s1661 = sand.u32 %s293, 1
          %s1662 = scalar_lea.sflag [#allocation8], %s1661
          %s1663 = sand.u32 %s293, 1
          %s1664 = smul.addr %s1663, 8
          %s1665 = scalar_lea.vmem [#allocation17], %s1664
          %1666 = dma.done %s1662, 128
        $region104: #{tpu_custom_call.1} parent=99 // pred_fallthru
          _
      $region100: #{tpu_custom_call.1} parent=5 // pred_fallthru
        _
    $region6: #{tpu_custom_call.1} parent=1 // loop_footer
      %s31 = sadd.s32 1, %s27
    $region7: #{tpu_custom_call.1} parent=1 // loop_footer_branch
      %26 = sbr.rel target = $region3
    $region8: #{tpu_custom_call.1} parent=1 // loop_exit
      _
    %1667 = vsyncpa [#allocation7], 1
    %s1668 = scalar_lea.sflag [#allocation7], 1
    %1669 = vsyncpa %s1668, 1
    %1670 = vsyncpa [#allocation10], 1
    %s1671 = scalar_lea.sflag [#allocation10], 1
    %1672 = vsyncpa %s1671, 1
    %1673 = vsyncpa [#allocation13], 1
    %1674 = vsyncpa [#allocation16], 1
    %1675 = vsyncpa [#allocation8], 1
    %s1676 = scalar_lea.sflag [#allocation8], 1
    %1677 = vsyncpa %s1676, 1

</llo_original>
